<compile_context>
chip_gen: v5e
topology: v5e:2x2
jax: 0.10.0
libtpu: 0.0.40
codegen_flags: <defaults>
</compile_context>

<pallas_src>
import functools

import jax
import jax.numpy as jnp
from jax.experimental import pallas as pl
from jax.experimental.pallas import tpu as pltpu

H_IN, H1, H2, H_OUT = 768, 512, 250, 1
H2_PAD = 256            # 250 padded to a lane multiple (zero padding is inert)
DROPOUT = 0.1


def _round_up(n, m):
    return ((n + m - 1) // m) * m


def _choose_blocks(B):
    """Pick (padded batch, block rows) for the batch grid axis."""
    b8 = _round_up(max(B, 8), 8)
    if b8 <= 16:
        return b8, b8                          # tiny: single block
    if b8 <= 1024:
        bb = _round_up((b8 + 1) // 2, 8)       # two blocks -> both v7x TCs busy
        return 2 * bb, bb
    bb = 512                                   # large: 512-row blocks
    return _round_up(b8, bb), bb


# ---------------------------------------------------------------------------
# Kernels
# ---------------------------------------------------------------------------

def _rdrop_head_train_kernel(x_ref, w1_ref, b1_ref, w2_ref, b2_ref, w3_ref,
                             b3_ref, keep_ref, out_ref):
    # l1 + ReLU: bf16 operands on the MXU, f32 accumulation.
    h1 = jnp.dot(x_ref[...], w1_ref[...],
                 preferred_element_type=jnp.float32) + b1_ref[...]
    h1 = jnp.maximum(h1, 0.0)

    # l2 + ReLU.
    h2 = jnp.dot(h1.astype(jnp.bfloat16), w2_ref[...],
                 preferred_element_type=jnp.float32) + b2_ref[...]
    h2 = jnp.maximum(h2, 0.0)

    # l3 fused with both R-Drop dropout passes: share hw = h2 * w3_row (VPU),
    # one lane reduction per pass (XLU).  w3_ref already carries 1/keep_prob.
    hw = h2 * w3_ref[...]                                          # (BB, 256)
    p1 = jnp.sum(hw * keep_ref[0].astype(jnp.float32), axis=-1, keepdims=True)
    p2 = jnp.sum(hw * keep_ref[1].astype(jnp.float32), axis=-1, keepdims=True)

    # Single lane-contiguous store: pred1 in column 0, pred2 in column 1.
    out_ref[...] = jnp.concatenate([p1, p2], axis=-1) + b3_ref[...]


def _rdrop_head_eval_kernel(x_ref, w1_ref, b1_ref, w2_ref, b2_ref, w3_ref,
                            b3_ref, out_ref):
    h1 = jnp.maximum(
        jnp.dot(x_ref[...], w1_ref[...],
                preferred_element_type=jnp.float32) + b1_ref[...], 0.0)
    h2 = jnp.maximum(
        jnp.dot(h1.astype(jnp.bfloat16), w2_ref[...],
                preferred_element_type=jnp.float32) + b2_ref[...], 0.0)
    p = jnp.sum(h2 * w3_ref[...], axis=-1, keepdims=True) + b3_ref[...]
    out_ref[...] = jnp.concatenate([p, p], axis=-1)   # pred1 == pred2 in eval


# ---------------------------------------------------------------------------
# Host-side wrappers
# ---------------------------------------------------------------------------

def prepare_head_params(w1, b1, w2, b2, w3, b3):
    """One-time weight prep (PyTorch [out,in] layout -> kernel layout).

    Call once at init and reuse; this hoists the transpose/pad/bf16-cast
    traffic out of the per-call path.
    """
    w1_t = jnp.asarray(w1).T.astype(jnp.bfloat16)                      # (768,512)
    w2_t = (jnp.zeros((H1, H2_PAD), jnp.float32)
            .at[:, :H2].set(jnp.asarray(w2).T).astype(jnp.bfloat16))   # (512,256)
    b1_r = jnp.asarray(b1).reshape(1, H1).astype(jnp.float32)
    b2_r = jnp.zeros((1, H2_PAD), jnp.float32).at[:, :H2].set(b2)
    w3_row = jnp.zeros((1, H2_PAD), jnp.float32).at[:, :H2].set(
        jnp.asarray(w3).reshape(-1))
    b3_r = jnp.asarray(b3).reshape(1, 1).astype(jnp.float32)
    return w1_t, b1_r, w2_t, b2_r, w3_row, b3_r


def _weight_specs():
    return [
        pl.BlockSpec((H_IN, H1), lambda i: (0, 0)),      # w1 (bf16)
        pl.BlockSpec((1, H1), lambda i: (0, 0)),         # b1
        pl.BlockSpec((H1, H2_PAD), lambda i: (0, 0)),    # w2 (bf16)
        pl.BlockSpec((1, H2_PAD), lambda i: (0, 0)),     # b2
        pl.BlockSpec((1, H2_PAD), lambda i: (0, 0)),     # w3 row
        pl.BlockSpec((1, 1), lambda i: (0, 0)),          # b3
    ]


def _pad_x_bf16(x, B, B_pad):
    if B_pad == B:
        return x.astype(jnp.bfloat16)          # no extra pad copy when aligned
    return jnp.zeros((B_pad, H_IN), jnp.bfloat16).at[:B].set(
        x.astype(jnp.bfloat16))


@functools.partial(jax.jit, static_argnames=("dropout",))
def _rdrop_head_train(x, w1_t, b1_r, w2_t, b2_r, w3_row, b3_r, keep_masks,
                      dropout=DROPOUT):
    B = x.shape[0]
    B_pad, BB = _choose_blocks(B)
    grid = (B_pad // BB,)

    x_bf = _pad_x_bf16(x, B, B_pad)

    # Fold the 1/keep_prob inverted-dropout rescale into the (1,256) w3 row.
    w3_s = w3_row * (1.0 / (1.0 - dropout))

    # bf16 keep masks: half the mask DMA; padded rows/lanes are zero (inert).
    keep = (jnp.zeros((2, B_pad, H2_PAD), jnp.bfloat16)
            .at[:, :B, :H2].set(keep_masks.astype(jnp.bfloat16)))

    out = pl.pallas_call(
        _rdrop_head_train_kernel,
        out_shape=jax.ShapeDtypeStruct((B_pad, 2), jnp.float32),
        grid=grid,
        in_specs=[pl.BlockSpec((BB, H_IN), lambda i: (i, 0))]
                 + _weight_specs()
                 + [pl.BlockSpec((2, BB, H2_PAD), lambda i: (0, i, 0))],
        out_specs=pl.BlockSpec((BB, 2), lambda i: (i, 0)),
        compiler_params=pltpu.CompilerParams(
            dimension_semantics=("parallel",)),
    )(x_bf, w1_t, b1_r, w2_t, b2_r, w3_s, b3_r, keep)

    return out[:B, 0:1], out[:B, 1:2]


@jax.jit
def _rdrop_head_eval(x, w1_t, b1_r, w2_t, b2_r, w3_row, b3_r):
    B = x.shape[0]
    B_pad, BB = _choose_blocks(B)
    grid = (B_pad // BB,)

    x_bf = _pad_x_bf16(x, B, B_pad)

    out = pl.pallas_call(
        _rdrop_head_eval_kernel,
        out_shape=jax.ShapeDtypeStruct((B_pad, 2), jnp.float32),
        grid=grid,
        in_specs=[pl.BlockSpec((BB, H_IN), lambda i: (i, 0))] + _weight_specs(),
        out_specs=pl.BlockSpec((BB, 2), lambda i: (i, 0)),
        compiler_params=pltpu.CompilerParams(
            dimension_semantics=("parallel",)),
    )(x_bf, w1_t, b1_r, w2_t, b2_r, w3_row, b3_r)

    return out[:B, 0:1], out[:B, 1:2]


def rdrop_head(x, prepared_params, keep_masks=None, dropout=DROPOUT):
    """R-Drop regression head.

    prepared_params: output of prepare_head_params (done once at init).
    keep_masks: optional (2, B, 250) {0,1} dropout keep masks (one independent
    mask per forward pass).  None => eval mode (dropout is identity).
    """
    if keep_masks is None:
        return _rdrop_head_eval(x, *prepared_params)
    return _rdrop_head_train(x, *prepared_params, keep_masks, dropout=dropout)


# ---------------------------------------------------------------------------
# Model-level plumbing / reference / demo
# ---------------------------------------------------------------------------

def mock_encoder(input_ids, attention_mask, embed_table):
    # TODO(synk): the pretrained allenai/longformer-base-4096 backbone is a
    # checkpoint-loaded transformer with no Pallas equivalent here; it is stood
    # in for by a deterministic embedding lookup -> last_hidden_state [B,S,768].
    hidden = embed_table[input_ids]
    return hidden * attention_mask[..., None].astype(hidden.dtype)


def model_forward(input_ids, attention_mask, embed_table, prepared_params,
                  keep_masks):
    """Mirrors Model.forward: encoder -> token index 1 -> head twice (R-Drop).

    The PyTorch code calls the (deterministic) encoder twice; both calls yield
    the identical encoding, so only the head differs between the two passes
    (independent dropout masks -> pred1, pred2).
    """
    hidden = mock_encoder(input_ids, attention_mask, embed_table)
    encoding = hidden[:, 1, :]                  # [B, 768]
    return rdrop_head(encoding, prepared_params, keep_masks=keep_masks)


def rdrop_head_ref(x, w1, b1, w2, b2, w3, b3, keep_masks, dropout=DROPOUT):
    """Pure-JAX reference of the head (same bf16 weight cast as the kernel)."""
    keep_prob = 1.0 - dropout
    h1 = jnp.maximum(
        jnp.dot(x.astype(jnp.bfloat16), w1.T.astype(jnp.bfloat16),
                preferred_element_type=jnp.float32) + b1, 0.0)
    h2 = jnp.maximum(
        jnp.dot(h1.astype(jnp.bfloat16), w2.T.astype(jnp.bfloat16),
                preferred_element_type=jnp.float32) + b2, 0.0)
    p1 = (h2 * keep_masks[0] / keep_prob) @ w3.T + b3
    p2 = (h2 * keep_masks[1] / keep_prob) @ w3.T + b3
    return p1, p2


def init_params(key):
    # PyTorch nn.Linear layout: weight [out, in], bias [out]
    ks = jax.random.split(key, 6)
    s = 0.02
    w1 = jax.random.normal(ks[0], (H1, H_IN), jnp.float32) * s
    b1 = jax.random.normal(ks[1], (H1,), jnp.float32) * s
    w2 = jax.random.normal(ks[2], (H2, H1), jnp.float32) * s
    b2 = jax.random.normal(ks[3], (H2,), jnp.float32) * s
    w3 = jax.random.normal(ks[4], (H_OUT, H2), jnp.float32) * s
    b3 = jax.random.normal(ks[5], (H_OUT,), jnp.float32) * s
    return w1, b1, w2, b2, w3, b3


if __name__ == "__main__":
    key = jax.random.PRNGKey(0)
    k_ids, k_emb, k_par, k_drop = jax.random.split(key, 4)

    B, S, VOCAB = 2, 8, 64
    input_ids = jax.random.randint(k_ids, (B, S), 0, VOCAB, dtype=jnp.int32)
    attention_mask = jnp.ones((B, S), dtype=jnp.int32)
    embed_table = jax.random.normal(k_emb, (VOCAB, H_IN), jnp.float32)

    params = init_params(k_par)
    prepared = prepare_head_params(*params)    # one-time weight prep (hoisted)

    # Two independent dropout keep masks (R-Drop: the head runs twice).
    keep_masks = jax.random.bernoulli(
        k_drop, 1.0 - DROPOUT, (2, B, H2)).astype(jnp.float32)

    pred1, pred2 = model_forward(input_ids, attention_mask, embed_table,
                                 prepared, keep_masks)
    jax.block_until_ready((pred1, pred2))

    assert pred1.shape == (B, 1) and pred2.shape == (B, 1)
    assert pred1.dtype == jnp.float32 and pred2.dtype == jnp.float32

    # Pure-JAX reference with the same masks.
    hidden = mock_encoder(input_ids, attention_mask, embed_table)
    ref1, ref2 = rdrop_head_ref(hidden[:, 1, :], *params, keep_masks)
    assert jnp.allclose(pred1, ref1, rtol=5e-2, atol=2e-3)
    assert jnp.allclose(pred2, ref2, rtol=5e-2, atol=2e-3)

    # Eval-mode variant (no dropout stream): pred1 == pred2 by construction.
    ev1, ev2 = rdrop_head(hidden[:, 1, :], prepared, keep_masks=None)
    jax.block_until_ready((ev1, ev2))
    assert ev1.shape == (B, 1) and jnp.allclose(ev1, ev2)

    print("KERNEL_OK")
</pallas_src>

<mosaic_0001>
module attributes {stable_mosaic.version = 11 : i64} {
  func.func @_rdrop_head_train_kernel(%arg0: i32, %arg1: memref<8x768xbf16, #tpu.memory_space<vmem>>, %arg2: memref<768x512xbf16, #tpu.memory_space<vmem>>, %arg3: memref<1x512xf32, #tpu.memory_space<vmem>>, %arg4: memref<512x256xbf16, #tpu.memory_space<vmem>>, %arg5: memref<1x256xf32, #tpu.memory_space<vmem>>, %arg6: memref<1x256xf32, #tpu.memory_space<vmem>>, %arg7: memref<1x1xf32, #tpu.memory_space<vmem>>, %arg8: memref<2x8x256xbf16, #tpu.memory_space<vmem>>, %arg9: memref<8x2xf32, #tpu.memory_space<vmem>>) attributes {dimension_semantics = [#tpu.dimension_semantics<parallel>], iteration_bounds = array<i64: 1>, scalar_prefetch = 0 : i64, scratch_operands = 0 : i64, tpu.core_type = #tpu.core_type<tc>, window_params = [{transform_indices = @transform_0, window_bounds = array<i64: 8, 768>}, {pipeline_mode = #tpu.pipeline_mode<synchronous>, transform_indices = @transform_1, window_bounds = array<i64: 768, 512>}, {pipeline_mode = #tpu.pipeline_mode<synchronous>, transform_indices = @transform_2, window_bounds = array<i64: 1, 512>}, {pipeline_mode = #tpu.pipeline_mode<synchronous>, transform_indices = @transform_3, window_bounds = array<i64: 512, 256>}, {pipeline_mode = #tpu.pipeline_mode<synchronous>, transform_indices = @transform_4, window_bounds = array<i64: 1, 256>}, {pipeline_mode = #tpu.pipeline_mode<synchronous>, transform_indices = @transform_5, window_bounds = array<i64: 1, 256>}, {pipeline_mode = #tpu.pipeline_mode<synchronous>, transform_indices = @transform_6, window_bounds = array<i64: 1, 1>}, {transform_indices = @transform_7, window_bounds = array<i64: 2, 8, 256>}, {transform_indices = @transform_8, window_bounds = array<i64: 8, 2>}]} {
    %c0 = arith.constant 0 : index
    %c0_0 = arith.constant 0 : index
    %0 = vector.load %arg1[%c0, %c0_0] : memref<8x768xbf16, #tpu.memory_space<vmem>>, vector<8x768xbf16>
    %c0_1 = arith.constant 0 : index
    %c0_2 = arith.constant 0 : index
    %1 = vector.load %arg2[%c0_1, %c0_2] : memref<768x512xbf16, #tpu.memory_space<vmem>>, vector<768x512xbf16>
    %cst = arith.constant dense<0.000000e+00> : vector<8x512xf32>
    %2 = tpu.matmul %0, %1, %cst {dimension_numbers = #tpu.dot_dimension_numbers<[1], [0], [0], [1], [0, 0, 1, 1], [], []>} : vector<8x768xbf16>, vector<768x512xbf16>, vector<8x512xf32> -> vector<8x512xf32>
    %c0_3 = arith.constant 0 : index
    %c0_4 = arith.constant 0 : index
    %3 = vector.load %arg3[%c0_3, %c0_4] : memref<1x512xf32, #tpu.memory_space<vmem>>, vector<1x512xf32>
    %4 = vector.broadcast %3 : vector<1x512xf32> to vector<8x512xf32>
    %5 = arith.addf %2, %4 : vector<8x512xf32>
    %cst_5 = arith.constant 0.000000e+00 : f32
    %6 = vector.broadcast %cst_5 : f32 to vector<8x512xf32>
    %7 = arith.maximumf %5, %6 : vector<8x512xf32>
    %8 = arith.truncf %7 : vector<8x512xf32> to vector<8x512xbf16>
    %c0_6 = arith.constant 0 : index
    %c0_7 = arith.constant 0 : index
    %9 = vector.load %arg4[%c0_6, %c0_7] : memref<512x256xbf16, #tpu.memory_space<vmem>>, vector<512x256xbf16>
    %cst_8 = arith.constant dense<0.000000e+00> : vector<8x256xf32>
    %10 = tpu.matmul %8, %9, %cst_8 {dimension_numbers = #tpu.dot_dimension_numbers<[1], [0], [0], [1], [0, 0, 1, 1], [], []>} : vector<8x512xbf16>, vector<512x256xbf16>, vector<8x256xf32> -> vector<8x256xf32>
    %c0_9 = arith.constant 0 : index
    %c0_10 = arith.constant 0 : index
    %11 = vector.load %arg5[%c0_9, %c0_10] : memref<1x256xf32, #tpu.memory_space<vmem>>, vector<1x256xf32>
    %12 = vector.broadcast %11 : vector<1x256xf32> to vector<8x256xf32>
    %13 = arith.addf %10, %12 : vector<8x256xf32>
    %cst_11 = arith.constant 0.000000e+00 : f32
    %14 = vector.broadcast %cst_11 : f32 to vector<8x256xf32>
    %15 = arith.maximumf %13, %14 : vector<8x256xf32>
    %c0_12 = arith.constant 0 : index
    %c0_13 = arith.constant 0 : index
    %16 = vector.load %arg6[%c0_12, %c0_13] : memref<1x256xf32, #tpu.memory_space<vmem>>, vector<1x256xf32>
    %17 = vector.broadcast %16 : vector<1x256xf32> to vector<8x256xf32>
    %18 = arith.mulf %15, %17 : vector<8x256xf32>
    %c0_14 = arith.constant 0 : index
    %c0_15 = arith.constant 0 : index
    %c0_16 = arith.constant 0 : index
    %19 = vector.load %arg8[%c0_14, %c0_15, %c0_16] : memref<2x8x256xbf16, #tpu.memory_space<vmem>>, vector<1x8x256xbf16>
    %20 = vector.shape_cast %19 : vector<1x8x256xbf16> to vector<8x256xbf16>
    %21 = arith.extf %20 : vector<8x256xbf16> to vector<8x256xf32>
    %22 = arith.mulf %18, %21 : vector<8x256xf32>
    %cst_17 = arith.constant dense<0.000000e+00> : vector<8xf32>
    %23 = vector.multi_reduction <add>, %22, %cst_17 [1] : vector<8x256xf32> to vector<8xf32>
    %24 = vector.shape_cast %23 : vector<8xf32> to vector<8x1xf32>
    %c1 = arith.constant 1 : index
    %c0_18 = arith.constant 0 : index
    %c0_19 = arith.constant 0 : index
    %25 = vector.load %arg8[%c1, %c0_18, %c0_19] : memref<2x8x256xbf16, #tpu.memory_space<vmem>>, vector<1x8x256xbf16>
    %26 = vector.shape_cast %25 : vector<1x8x256xbf16> to vector<8x256xbf16>
    %27 = arith.extf %26 : vector<8x256xbf16> to vector<8x256xf32>
    %28 = arith.mulf %18, %27 : vector<8x256xf32>
    %cst_20 = arith.constant dense<0.000000e+00> : vector<8xf32>
    %29 = vector.multi_reduction <add>, %28, %cst_20 [1] : vector<8x256xf32> to vector<8xf32>
    %30 = vector.shape_cast %29 : vector<8xf32> to vector<8x1xf32>
    %31 = tpu.concatenate %24, %30 in 1 : vector<8x1xf32>, vector<8x1xf32> -> vector<8x2xf32>
    %c0_21 = arith.constant 0 : index
    %c0_22 = arith.constant 0 : index
    %32 = vector.load %arg7[%c0_21, %c0_22] : memref<1x1xf32, #tpu.memory_space<vmem>>, vector<1x1xf32>
    %33 = vector.broadcast %32 : vector<1x1xf32> to vector<8x2xf32>
    %34 = arith.addf %31, %33 : vector<8x2xf32>
    %c0_23 = arith.constant 0 : index
    %c0_24 = arith.constant 0 : index
    %35 = vector.load %arg9[%c0_23, %c0_24] : memref<8x2xf32, #tpu.memory_space<vmem>>, vector<8x2xf32>
    tpu.vector_store %arg9[%c0_23, %c0_24], %34 {strides = array<i32>} : memref<8x2xf32, #tpu.memory_space<vmem>>, vector<8x2xf32>,
    return
  }
  func.func @transform_0(%arg0: i32) -> (i32, i32) {
    %c0_i32 = arith.constant 0 : i32
    %c0_i32_0 = arith.constant 0 : i32
    return %arg0, %c0_i32 : i32, i32
  }
  func.func @transform_1(%arg0: i32) -> (i32, i32) {
    %c0_i32 = arith.constant 0 : i32
    %c0_i32_0 = arith.constant 0 : i32
    %c0_i32_1 = arith.constant 0 : i32
    return %c0_i32, %c0_i32_0 : i32, i32
  }
  func.func @transform_2(%arg0: i32) -> (i32, i32) {
    %c0_i32 = arith.constant 0 : i32
    %c0_i32_0 = arith.constant 0 : i32
    %c0_i32_1 = arith.constant 0 : i32
    return %c0_i32, %c0_i32_0 : i32, i32
  }
  func.func @transform_3(%arg0: i32) -> (i32, i32) {
    %c0_i32 = arith.constant 0 : i32
    %c0_i32_0 = arith.constant 0 : i32
    %c0_i32_1 = arith.constant 0 : i32
    return %c0_i32, %c0_i32_0 : i32, i32
  }
  func.func @transform_4(%arg0: i32) -> (i32, i32) {
    %c0_i32 = arith.constant 0 : i32
    %c0_i32_0 = arith.constant 0 : i32
    %c0_i32_1 = arith.constant 0 : i32
    return %c0_i32, %c0_i32_0 : i32, i32
  }
  func.func @transform_5(%arg0: i32) -> (i32, i32) {
    %c0_i32 = arith.constant 0 : i32
    %c0_i32_0 = arith.constant 0 : i32
    %c0_i32_1 = arith.constant 0 : i32
    return %c0_i32, %c0_i32_0 : i32, i32
  }
  func.func @transform_6(%arg0: i32) -> (i32, i32) {
    %c0_i32 = arith.constant 0 : i32
    %c0_i32_0 = arith.constant 0 : i32
    %c0_i32_1 = arith.constant 0 : i32
    return %c0_i32, %c0_i32_0 : i32, i32
  }
  func.func @transform_7(%arg0: i32) -> (i32, i32, i32) {
    %c0_i32 = arith.constant 0 : i32
    %c0_i32_0 = arith.constant 0 : i32
    %c0_i32_1 = arith.constant 0 : i32
    return %c0_i32, %arg0, %c0_i32_0 : i32, i32, i32
  }
  func.func @transform_8(%arg0: i32) -> (i32, i32) {
    %c0_i32 = arith.constant 0 : i32
    %c0_i32_0 = arith.constant 0 : i32
    return %arg0, %c0_i32 : i32, i32
  }
}

</mosaic_0001>

<llo_original>
// kernel: _rdrop_head_train.1
$region0: #{_rdrop_head_train.1}
  #allocation0 [shape = 'u32[]', space=smem, size = 0x4, offset = 0x4, fixed_abs, tag = 'smem constant byte address 0x4 - core index']
  #allocation1 [shape = 'u32[72,128]{1,0:T(1,128)}', space=vmem, size = 0x9000, scoped, tag = 'internal scratch']
  #allocation2 [shape = 'f32[1,1]{1,0:T(1,128)S(1)}', space=vmem, size = 0x200, scoped, tag = 'scoped memory for _rdrop_head_train.1']
  %s0 = inlined_call_operand.vmem [shape: bf16[8,768], index: 0, kind: input, shape index: {}]
  %s1 = inlined_call_operand.hbm [shape: bf16[768,512], index: 1, kind: input, shape index: {}]
  %s2 = inlined_call_operand.vmem [shape: f32[1,512], index: 2, kind: input, shape index: {}]
  %s3 = inlined_call_operand.hbm [shape: bf16[512,256], index: 3, kind: input, shape index: {}]
  %s4 = inlined_call_operand.vmem [shape: f32[1,256], index: 4, kind: input, shape index: {}]
  %s5 = inlined_call_operand.vmem [shape: f32[1,256], index: 5, kind: input, shape index: {}]
  %s6 = inlined_call_operand.<no memory space> [shape: f32[1,1], index: 6, kind: input, shape index: {}]
  %s7 = inlined_call_operand.vmem [shape: bf16[2,8,256], index: 7, kind: input, shape index: {}]
  %s8 = inlined_call_operand.vmem [shape: f32[8,2], index: 8, kind: output, shape index: {}]
  %s9 = sld [smem:[#allocation0]]
  $region50: #{_rdrop_head_train.1} parent=0
    _
  %s11 = ssub.s32 1, %s9
  %s12 = scalar_select 0, %s11, %s9
  %v13 = vstv %s6
  %14 = vst [vmem:[#allocation2] sm:$0x1] %v13
  $region1: #{_rdrop_head_train.1} parent=0
    #allocation3 [shape = 'u8[786432]{0}', space=vmem, size = 0xc0000, scoped, tag = 'input window, operand 1, single buffered']
    #allocation4 [shape = 's32[1]{0}', space=sflag, size = 0x4, scoped, tag = 'scoped memory for _rdrop_head_train.1']
    #allocation5 [shape = 'u8[262144]{0}', space=vmem, size = 0x40000, scoped, tag = 'input window, operand 3, single buffered']
    #allocation6 [shape = 's32[1]{0}', space=sflag, size = 0x4, scoped, tag = 'scoped memory for _rdrop_head_train.1']
    %15 = vsyncpa [#allocation4], 0
    %16 = vsyncpa [#allocation6], 0
    // Predicated region
    $region2: #{_rdrop_head_train.1} parent=1 // pred_check
      _
    $region3: #{_rdrop_head_train.1} parent=1 // pred_check_branch
      %18 = sbr.rel (0) target = $region5
    $region4: #{_rdrop_head_train.1} parent=1 // pred_region
      _
    $region5: #{_rdrop_head_train.1} parent=1 // pred_fallthru
      _
    // Predicated region
    $region6: #{_rdrop_head_train.1} parent=1 // pred_check
      _
    $region7: #{_rdrop_head_train.1} parent=1 // pred_check_branch
      %20 = sbr.rel (0) target = $region9
    $region8: #{_rdrop_head_train.1} parent=1 // pred_region
      %22 = vsyncadd [#allocation4], 0
      %s23 = sshll.u32 %s1, 4
      %s24 = int_to_ptr.hbm [resolvable:$true] %s23
      %s25 = sshll.u32 [#allocation3], 4
      %s26 = int_to_ptr.vmem [resolvable:$true] %s25
      %31 = dma.hbm_to_vmem [thread:$0]  %s24, 24576, %s26, [#allocation4], 256, 256, 16
    $region9: #{_rdrop_head_train.1} parent=1 // pred_fallthru
      _
    // Predicated region
    $region10: #{_rdrop_head_train.1} parent=1 // pred_check
      _
    $region11: #{_rdrop_head_train.1} parent=1 // pred_check_branch
      %33 = sbr.rel (0) target = $region13
    $region12: #{_rdrop_head_train.1} parent=1 // pred_region
      _
    $region13: #{_rdrop_head_train.1} parent=1 // pred_fallthru
      _
    // Predicated region
    $region14: #{_rdrop_head_train.1} parent=1 // pred_check
      _
    $region15: #{_rdrop_head_train.1} parent=1 // pred_check_branch
      %35 = sbr.rel (0) target = $region17
    $region16: #{_rdrop_head_train.1} parent=1 // pred_region
      %37 = vsyncadd [#allocation6], 0
      %s38 = sshll.u32 %s3, 4
      %s39 = int_to_ptr.hbm [resolvable:$true] %s38
      %s40 = sshll.u32 [#allocation5], 4
      %s41 = int_to_ptr.vmem [resolvable:$true] %s40
      %46 = dma.hbm_to_vmem [thread:$0]  %s39, 8192, %s41, [#allocation6], 128, 128, 8
    $region17: #{_rdrop_head_train.1} parent=1 // pred_fallthru
      _
    // Predicated region
    $region18: #{_rdrop_head_train.1} parent=1 // pred_check
      _
    $region19: #{_rdrop_head_train.1} parent=1 // pred_check_branch
      %48 = sbr.rel (0) target = $region21
    $region20: #{_rdrop_head_train.1} parent=1 // pred_region
      _
    $region21: #{_rdrop_head_train.1} parent=1 // pred_fallthru
      _
    // Predicated region
    $region22: #{_rdrop_head_train.1} parent=1 // pred_check
      _
    $region23: #{_rdrop_head_train.1} parent=1 // pred_check_branch
      %50 = sbr.rel (0) target = $region25
    $region24: #{_rdrop_head_train.1} parent=1 // pred_region
      _
    $region25: #{_rdrop_head_train.1} parent=1 // pred_fallthru
      _
    // Predicated region
    $region26: #{_rdrop_head_train.1} parent=1 // pred_check
      _
    $region27: #{_rdrop_head_train.1} parent=1 // pred_check_branch
      %52 = sbr.rel (0) target = $region29
    $region28: #{_rdrop_head_train.1} parent=1 // pred_region
      _
    $region29: #{_rdrop_head_train.1} parent=1 // pred_fallthru
      _
    // Predicated region
    $region30: #{_rdrop_head_train.1} parent=1 // pred_check
      _
    $region31: #{_rdrop_head_train.1} parent=1 // pred_check_branch
      %54 = sbr.rel (0) target = $region33
    $region32: #{_rdrop_head_train.1} parent=1 // pred_region
      _
    $region33: #{_rdrop_head_train.1} parent=1 // pred_fallthru
      _
    // Predicated region
    $region34: #{_rdrop_head_train.1} parent=1 // pred_check
      _
    $region35: #{_rdrop_head_train.1} parent=1 // pred_check_branch
      %56 = sbr.rel (0) target = $region37
    $region36: #{_rdrop_head_train.1} parent=1 // pred_region
      %58 = dma.done [#allocation4], 24576
    $region37: #{_rdrop_head_train.1} parent=1 // pred_fallthru
      _
    // Predicated region
    $region38: #{_rdrop_head_train.1} parent=1 // pred_check
      _
    $region39: #{_rdrop_head_train.1} parent=1 // pred_check_branch
      %60 = sbr.rel (0) target = $region41
    $region40: #{_rdrop_head_train.1} parent=1 // pred_region
      %62 = dma.done [#allocation6], 8192
    $region41: #{_rdrop_head_train.1} parent=1 // pred_fallthru
      _
    %v63 = vld [vmem:[%s0] sm:$0xff]
    %v64 = vld [vmem:[%s0 + $0x8] sm:$0xff]
    %v65 = vld [vmem:[%s0 + $0x10] sm:$0xff]
    %v66 = vld [vmem:[#allocation3] sm:$0xff]
    %v67 = vld [vmem:[#allocation3 + $0x8] sm:$0xff]
    %v68 = vld [vmem:[#allocation3 + $0x10] sm:$0xff]
    %v69 = vld [vmem:[#allocation3 + $0x18] sm:$0xff]
    %v70 = vld [vmem:[#allocation3 + $0x20] sm:$0xff]
    %v71 = vld [vmem:[#allocation3 + $0x28] sm:$0xff]
    %v72 = vld [vmem:[#allocation3 + $0x30] sm:$0xff]
    %v73 = vld [vmem:[#allocation3 + $0x38] sm:$0xff]
    %v74 = vld [vmem:[#allocation3 + $0x40] sm:$0xff]
    %v75 = vld [vmem:[#allocation3 + $0x48] sm:$0xff]
    %v76 = vld [vmem:[#allocation3 + $0x50] sm:$0xff]
    %v77 = vld [vmem:[#allocation3 + $0x58] sm:$0xff]
    %v78 = vld [vmem:[#allocation3 + $0x60] sm:$0xff]
    %v79 = vld [vmem:[#allocation3 + $0x68] sm:$0xff]
    %v80 = vld [vmem:[#allocation3 + $0x70] sm:$0xff]
    %v81 = vld [vmem:[#allocation3 + $0x78] sm:$0xff]
    %v82 = vld [vmem:[#allocation3 + $0x80] sm:$0xff]
    %v83 = vld [vmem:[#allocation3 + $0x88] sm:$0xff]
    %v84 = vld [vmem:[#allocation3 + $0x90] sm:$0xff]
    %v85 = vld [vmem:[#allocation3 + $0x98] sm:$0xff]
    %v86 = vld [vmem:[#allocation3 + $0xa0] sm:$0xff]
    %v87 = vld [vmem:[#allocation3 + $0xa8] sm:$0xff]
    %v88 = vld [vmem:[#allocation3 + $0xb0] sm:$0xff]
    %v89 = vld [vmem:[#allocation3 + $0xb8] sm:$0xff]
    %v90 = vld [vmem:[#allocation3 + $0xc0] sm:$0xff]
    %v91 = vld [vmem:[#allocation3 + $0xc8] sm:$0xff]
    %v92 = vld [vmem:[#allocation3 + $0xd0] sm:$0xff]
    %v93 = vld [vmem:[#allocation3 + $0xd8] sm:$0xff]
    %v94 = vld [vmem:[#allocation3 + $0xe0] sm:$0xff]
    %v95 = vld [vmem:[#allocation3 + $0xe8] sm:$0xff]
    %v96 = vld [vmem:[#allocation3 + $0xf0] sm:$0xff]
    %v97 = vld [vmem:[#allocation3 + $0xf8] sm:$0xff]
    %v98 = vld [vmem:[#allocation3 + $0x100] sm:$0xff]
    %v99 = vld [vmem:[#allocation3 + $0x108] sm:$0xff]
    %v100 = vld [vmem:[#allocation3 + $0x110] sm:$0xff]
    %v101 = vld [vmem:[#allocation3 + $0x118] sm:$0xff]
    %v102 = vld [vmem:[#allocation3 + $0x120] sm:$0xff]
    %v103 = vld [vmem:[#allocation3 + $0x128] sm:$0xff]
    %v104 = vld [vmem:[#allocation3 + $0x130] sm:$0xff]
    %v105 = vld [vmem:[#allocation3 + $0x138] sm:$0xff]
    %v106 = vld [vmem:[#allocation3 + $0x140] sm:$0xff]
    %v107 = vld [vmem:[#allocation3 + $0x148] sm:$0xff]
    %v108 = vld [vmem:[#allocation3 + $0x150] sm:$0xff]
    %v109 = vld [vmem:[#allocation3 + $0x158] sm:$0xff]
    %v110 = vld [vmem:[#allocation3 + $0x160] sm:$0xff]
    %v111 = vld [vmem:[#allocation3 + $0x168] sm:$0xff]
    %v112 = vld [vmem:[#allocation3 + $0x170] sm:$0xff]
    %v113 = vld [vmem:[#allocation3 + $0x178] sm:$0xff]
    %v114 = vld [vmem:[#allocation3 + $0x180] sm:$0xff]
    %v115 = vld [vmem:[#allocation3 + $0x188] sm:$0xff]
    %v116 = vld [vmem:[#allocation3 + $0x190] sm:$0xff]
    %v117 = vld [vmem:[#allocation3 + $0x198] sm:$0xff]
    %v118 = vld [vmem:[#allocation3 + $0x1a0] sm:$0xff]
    %v119 = vld [vmem:[#allocation3 + $0x1a8] sm:$0xff]
    %v120 = vld [vmem:[#allocation3 + $0x1b0] sm:$0xff]
    %v121 = vld [vmem:[#allocation3 + $0x1b8] sm:$0xff]
    %v122 = vld [vmem:[#allocation3 + $0x1c0] sm:$0xff]
    %v123 = vld [vmem:[#allocation3 + $0x1c8] sm:$0xff]
    %v124 = vld [vmem:[#allocation3 + $0x1d0] sm:$0xff]
    %v125 = vld [vmem:[#allocation3 + $0x1d8] sm:$0xff]
    %v126 = vld [vmem:[#allocation3 + $0x1e0] sm:$0xff]
    %v127 = vld [vmem:[#allocation3 + $0x1e8] sm:$0xff]
    %v128 = vld [vmem:[#allocation3 + $0x1f0] sm:$0xff]
    %v129 = vld [vmem:[#allocation3 + $0x1f8] sm:$0xff]
    %v130 = vld [vmem:[#allocation3 + $0x200] sm:$0xff]
    %v131 = vld [vmem:[#allocation3 + $0x208] sm:$0xff]
    %v132 = vld [vmem:[#allocation3 + $0x210] sm:$0xff]
    %v133 = vld [vmem:[#allocation3 + $0x218] sm:$0xff]
    %v134 = vld [vmem:[#allocation3 + $0x220] sm:$0xff]
    %v135 = vld [vmem:[#allocation3 + $0x228] sm:$0xff]
    %v136 = vld [vmem:[#allocation3 + $0x230] sm:$0xff]
    %v137 = vld [vmem:[#allocation3 + $0x238] sm:$0xff]
    %v138 = vld [vmem:[#allocation3 + $0x240] sm:$0xff]
    %v139 = vld [vmem:[#allocation3 + $0x248] sm:$0xff]
    %v140 = vld [vmem:[#allocation3 + $0x250] sm:$0xff]
    %v141 = vld [vmem:[#allocation3 + $0x258] sm:$0xff]
    %v142 = vld [vmem:[#allocation3 + $0x260] sm:$0xff]
    %v143 = vld [vmem:[#allocation3 + $0x268] sm:$0xff]
    %v144 = vld [vmem:[#allocation3 + $0x270] sm:$0xff]
    %v145 = vld [vmem:[#allocation3 + $0x278] sm:$0xff]
    %v146 = vld [vmem:[#allocation3 + $0x280] sm:$0xff]
    %v147 = vld [vmem:[#allocation3 + $0x288] sm:$0xff]
    %v148 = vld [vmem:[#allocation3 + $0x290] sm:$0xff]
    %v149 = vld [vmem:[#allocation3 + $0x298] sm:$0xff]
    %v150 = vld [vmem:[#allocation3 + $0x2a0] sm:$0xff]
    %v151 = vld [vmem:[#allocation3 + $0x2a8] sm:$0xff]
    %v152 = vld [vmem:[#allocation3 + $0x2b0] sm:$0xff]
    %v153 = vld [vmem:[#allocation3 + $0x2b8] sm:$0xff]
    %v154 = vld [vmem:[#allocation3 + $0x2c0] sm:$0xff]
    %v155 = vld [vmem:[#allocation3 + $0x2c8] sm:$0xff]
    %v156 = vld [vmem:[#allocation3 + $0x2d0] sm:$0xff]
    %v157 = vld [vmem:[#allocation3 + $0x2d8] sm:$0xff]
    %v158 = vld [vmem:[#allocation3 + $0x2e0] sm:$0xff]
    %v159 = vld [vmem:[#allocation3 + $0x2e8] sm:$0xff]
    %v160 = vld [vmem:[#allocation3 + $0x2f0] sm:$0xff]
    %v161 = vld [vmem:[#allocation3 + $0x2f8] sm:$0xff]
    %v162 = vld [vmem:[#allocation3 + $0x300] sm:$0xff]
    %v163 = vld [vmem:[#allocation3 + $0x308] sm:$0xff]
    %v164 = vld [vmem:[#allocation3 + $0x310] sm:$0xff]
    %v165 = vld [vmem:[#allocation3 + $0x318] sm:$0xff]
    %v166 = vld [vmem:[#allocation3 + $0x320] sm:$0xff]
    %v167 = vld [vmem:[#allocation3 + $0x328] sm:$0xff]
    %v168 = vld [vmem:[#allocation3 + $0x330] sm:$0xff]
    %v169 = vld [vmem:[#allocation3 + $0x338] sm:$0xff]
    %v170 = vld [vmem:[#allocation3 + $0x340] sm:$0xff]
    %v171 = vld [vmem:[#allocation3 + $0x348] sm:$0xff]
    %v172 = vld [vmem:[#allocation3 + $0x350] sm:$0xff]
    %v173 = vld [vmem:[#allocation3 + $0x358] sm:$0xff]
    %v174 = vld [vmem:[#allocation3 + $0x360] sm:$0xff]
    %v175 = vld [vmem:[#allocation3 + $0x368] sm:$0xff]
    %v176 = vld [vmem:[#allocation3 + $0x370] sm:$0xff]
    %v177 = vld [vmem:[#allocation3 + $0x378] sm:$0xff]
    %v178 = vld [vmem:[#allocation3 + $0x380] sm:$0xff]
    %v179 = vld [vmem:[#allocation3 + $0x388] sm:$0xff]
    %v180 = vld [vmem:[#allocation3 + $0x390] sm:$0xff]
    %v181 = vld [vmem:[#allocation3 + $0x398] sm:$0xff]
    %v182 = vld [vmem:[#allocation3 + $0x3a0] sm:$0xff]
    %v183 = vld [vmem:[#allocation3 + $0x3a8] sm:$0xff]
    %v184 = vld [vmem:[#allocation3 + $0x3b0] sm:$0xff]
    %v185 = vld [vmem:[#allocation3 + $0x3b8] sm:$0xff]
    %v186 = vld [vmem:[#allocation3 + $0x3c0] sm:$0xff]
    %v187 = vld [vmem:[#allocation3 + $0x3c8] sm:$0xff]
    %v188 = vld [vmem:[#allocation3 + $0x3d0] sm:$0xff]
    %v189 = vld [vmem:[#allocation3 + $0x3d8] sm:$0xff]
    %v190 = vld [vmem:[#allocation3 + $0x3e0] sm:$0xff]
    %v191 = vld [vmem:[#allocation3 + $0x3e8] sm:$0xff]
    %v192 = vld [vmem:[#allocation3 + $0x3f0] sm:$0xff]
    %v193 = vld [vmem:[#allocation3 + $0x3f8] sm:$0xff]
    %v194 = vld [vmem:[#allocation3 + $0x400] sm:$0xff]
    %v195 = vld [vmem:[#allocation3 + $0x408] sm:$0xff]
    %v196 = vld [vmem:[#allocation3 + $0x410] sm:$0xff]
    %v197 = vld [vmem:[#allocation3 + $0x418] sm:$0xff]
    %v198 = vld [vmem:[#allocation3 + $0x420] sm:$0xff]
    %v199 = vld [vmem:[#allocation3 + $0x428] sm:$0xff]
    %v200 = vld [vmem:[#allocation3 + $0x430] sm:$0xff]
    %v201 = vld [vmem:[#allocation3 + $0x438] sm:$0xff]
    %v202 = vld [vmem:[#allocation3 + $0x440] sm:$0xff]
    %v203 = vld [vmem:[#allocation3 + $0x448] sm:$0xff]
    %v204 = vld [vmem:[#allocation3 + $0x450] sm:$0xff]
    %v205 = vld [vmem:[#allocation3 + $0x458] sm:$0xff]
    %v206 = vld [vmem:[#allocation3 + $0x460] sm:$0xff]
    %v207 = vld [vmem:[#allocation3 + $0x468] sm:$0xff]
    %v208 = vld [vmem:[#allocation3 + $0x470] sm:$0xff]
    %v209 = vld [vmem:[#allocation3 + $0x478] sm:$0xff]
    %v210 = vld [vmem:[#allocation3 + $0x480] sm:$0xff]
    %v211 = vld [vmem:[#allocation3 + $0x488] sm:$0xff]
    %v212 = vld [vmem:[#allocation3 + $0x490] sm:$0xff]
    %v213 = vld [vmem:[#allocation3 + $0x498] sm:$0xff]
    %v214 = vld [vmem:[#allocation3 + $0x4a0] sm:$0xff]
    %v215 = vld [vmem:[#allocation3 + $0x4a8] sm:$0xff]
    %v216 = vld [vmem:[#allocation3 + $0x4b0] sm:$0xff]
    %v217 = vld [vmem:[#allocation3 + $0x4b8] sm:$0xff]
    %v218 = vld [vmem:[#allocation3 + $0x4c0] sm:$0xff]
    %v219 = vld [vmem:[#allocation3 + $0x4c8] sm:$0xff]
    %v220 = vld [vmem:[#allocation3 + $0x4d0] sm:$0xff]
    %v221 = vld [vmem:[#allocation3 + $0x4d8] sm:$0xff]
    %v222 = vld [vmem:[#allocation3 + $0x4e0] sm:$0xff]
    %v223 = vld [vmem:[#allocation3 + $0x4e8] sm:$0xff]
    %v224 = vld [vmem:[#allocation3 + $0x4f0] sm:$0xff]
    %v225 = vld [vmem:[#allocation3 + $0x4f8] sm:$0xff]
    %v226 = vld [vmem:[#allocation3 + $0x500] sm:$0xff]
    %v227 = vld [vmem:[#allocation3 + $0x508] sm:$0xff]
    %v228 = vld [vmem:[#allocation3 + $0x510] sm:$0xff]
    %v229 = vld [vmem:[#allocation3 + $0x518] sm:$0xff]
    %v230 = vld [vmem:[#allocation3 + $0x520] sm:$0xff]
    %v231 = vld [vmem:[#allocation3 + $0x528] sm:$0xff]
    %v232 = vld [vmem:[#allocation3 + $0x530] sm:$0xff]
    %v233 = vld [vmem:[#allocation3 + $0x538] sm:$0xff]
    %v234 = vld [vmem:[#allocation3 + $0x540] sm:$0xff]
    %v235 = vld [vmem:[#allocation3 + $0x548] sm:$0xff]
    %v236 = vld [vmem:[#allocation3 + $0x550] sm:$0xff]
    %v237 = vld [vmem:[#allocation3 + $0x558] sm:$0xff]
    %v238 = vld [vmem:[#allocation3 + $0x560] sm:$0xff]
    %v239 = vld [vmem:[#allocation3 + $0x568] sm:$0xff]
    %v240 = vld [vmem:[#allocation3 + $0x570] sm:$0xff]
    %v241 = vld [vmem:[#allocation3 + $0x578] sm:$0xff]
    %v242 = vld [vmem:[#allocation3 + $0x580] sm:$0xff]
    %v243 = vld [vmem:[#allocation3 + $0x588] sm:$0xff]
    %v244 = vld [vmem:[#allocation3 + $0x590] sm:$0xff]
    %v245 = vld [vmem:[#allocation3 + $0x598] sm:$0xff]
    %v246 = vld [vmem:[#allocation3 + $0x5a0] sm:$0xff]
    %v247 = vld [vmem:[#allocation3 + $0x5a8] sm:$0xff]
    %v248 = vld [vmem:[#allocation3 + $0x5b0] sm:$0xff]
    %v249 = vld [vmem:[#allocation3 + $0x5b8] sm:$0xff]
    %v250 = vld [vmem:[#allocation3 + $0x5c0] sm:$0xff]
    %v251 = vld [vmem:[#allocation3 + $0x5c8] sm:$0xff]
    %v252 = vld [vmem:[#allocation3 + $0x5d0] sm:$0xff]
    %v253 = vld [vmem:[#allocation3 + $0x5d8] sm:$0xff]
    %v254 = vld [vmem:[#allocation3 + $0x5e0] sm:$0xff]
    %v255 = vld [vmem:[#allocation3 + $0x5e8] sm:$0xff]
    %v256 = vld [vmem:[#allocation3 + $0x5f0] sm:$0xff]
    %v257 = vld [vmem:[#allocation3 + $0x5f8] sm:$0xff]
    %v258 = vld [vmem:[%s2] sm:$0xf]
    %v260 = vperm.slane %v258, 0
    %v261 = vperm.slane %v258, 1
    %v262 = vperm.slane %v258, 2
    %v263 = vperm.slane %v258, 3
    %v271 = vunpack.c.l.b16 %v63
    %v272 = vunpack.c.h.b16 %v63
    %v273 = vunpack.c.l.b16 %v64
    %v274 = vunpack.c.h.b16 %v64
    %v275 = vunpack.c.l.b16 %v65
    %v276 = vunpack.c.h.b16 %v65
    %v277 = vpack.c.b16 %v271, %v271
    %v278 = vpack.c.b16 %v272, %v272
    %v279 = vpack.c.b16 %v273, %v273
    %v280 = vpack.c.b16 %v274, %v274
    %v281 = vpack.c.b16 %v275, %v275
    %v282 = vpack.c.b16 %v276, %v276
    %v481 = vunpack.c.l.b16 %v66
    %v482 = vunpack.c.h.b16 %v66
    %v483 = vunpack.c.l.b16 %v67
    %v484 = vunpack.c.h.b16 %v67
    %v485 = vunpack.c.l.b16 %v68
    %v486 = vunpack.c.h.b16 %v68
    %v487 = vunpack.c.l.b16 %v69
    %v488 = vunpack.c.h.b16 %v69
    %v489 = vunpack.c.l.b16 %v70
    %v490 = vunpack.c.h.b16 %v70
    %v491 = vunpack.c.l.b16 %v71
    %v492 = vunpack.c.h.b16 %v71
    %v493 = vunpack.c.l.b16 %v72
    %v494 = vunpack.c.h.b16 %v72
    %v495 = vunpack.c.l.b16 %v73
    %v496 = vunpack.c.h.b16 %v73
    %v497 = vunpack.c.l.b16 %v74
    %v498 = vunpack.c.h.b16 %v74
    %v499 = vunpack.c.l.b16 %v75
    %v500 = vunpack.c.h.b16 %v75
    %v501 = vunpack.c.l.b16 %v76
    %v502 = vunpack.c.h.b16 %v76
    %v503 = vunpack.c.l.b16 %v77
    %v504 = vunpack.c.h.b16 %v77
    %v505 = vunpack.c.l.b16 %v78
    %v506 = vunpack.c.h.b16 %v78
    %v507 = vunpack.c.l.b16 %v79
    %v508 = vunpack.c.h.b16 %v79
    %v509 = vunpack.c.l.b16 %v80
    %v510 = vunpack.c.h.b16 %v80
    %v511 = vunpack.c.l.b16 %v81
    %v512 = vunpack.c.h.b16 %v81
    %v513 = vunpack.c.l.b16 %v82
    %v514 = vunpack.c.h.b16 %v82
    %v515 = vunpack.c.l.b16 %v83
    %v516 = vunpack.c.h.b16 %v83
    %v517 = vunpack.c.l.b16 %v84
    %v518 = vunpack.c.h.b16 %v84
    %v519 = vunpack.c.l.b16 %v85
    %v520 = vunpack.c.h.b16 %v85
    %v521 = vunpack.c.l.b16 %v86
    %v522 = vunpack.c.h.b16 %v86
    %v523 = vunpack.c.l.b16 %v87
    %v524 = vunpack.c.h.b16 %v87
    %v525 = vunpack.c.l.b16 %v88
    %v526 = vunpack.c.h.b16 %v88
    %v527 = vunpack.c.l.b16 %v89
    %v528 = vunpack.c.h.b16 %v89
    %v529 = vunpack.c.l.b16 %v90
    %v530 = vunpack.c.h.b16 %v90
    %v531 = vunpack.c.l.b16 %v91
    %v532 = vunpack.c.h.b16 %v91
    %v533 = vunpack.c.l.b16 %v92
    %v534 = vunpack.c.h.b16 %v92
    %v535 = vunpack.c.l.b16 %v93
    %v536 = vunpack.c.h.b16 %v93
    %v537 = vunpack.c.l.b16 %v94
    %v538 = vunpack.c.h.b16 %v94
    %v539 = vunpack.c.l.b16 %v95
    %v540 = vunpack.c.h.b16 %v95
    %v541 = vunpack.c.l.b16 %v96
    %v542 = vunpack.c.h.b16 %v96
    %v543 = vunpack.c.l.b16 %v97
    %v544 = vunpack.c.h.b16 %v97
    %v545 = vunpack.c.l.b16 %v98
    %v546 = vunpack.c.h.b16 %v98
    %v547 = vunpack.c.l.b16 %v99
    %v548 = vunpack.c.h.b16 %v99
    %v549 = vunpack.c.l.b16 %v100
    %v550 = vunpack.c.h.b16 %v100
    %v551 = vunpack.c.l.b16 %v101
    %v552 = vunpack.c.h.b16 %v101
    %v553 = vunpack.c.l.b16 %v102
    %v554 = vunpack.c.h.b16 %v102
    %v555 = vunpack.c.l.b16 %v103
    %v556 = vunpack.c.h.b16 %v103
    %v557 = vunpack.c.l.b16 %v104
    %v558 = vunpack.c.h.b16 %v104
    %v559 = vunpack.c.l.b16 %v105
    %v560 = vunpack.c.h.b16 %v105
    %v561 = vunpack.c.l.b16 %v106
    %v562 = vunpack.c.h.b16 %v106
    %v563 = vunpack.c.l.b16 %v107
    %v564 = vunpack.c.h.b16 %v107
    %v565 = vunpack.c.l.b16 %v108
    %v566 = vunpack.c.h.b16 %v108
    %v567 = vunpack.c.l.b16 %v109
    %v568 = vunpack.c.h.b16 %v109
    %v569 = vunpack.c.l.b16 %v110
    %v570 = vunpack.c.h.b16 %v110
    %v571 = vunpack.c.l.b16 %v111
    %v572 = vunpack.c.h.b16 %v111
    %v573 = vunpack.c.l.b16 %v112
    %v574 = vunpack.c.h.b16 %v112
    %v575 = vunpack.c.l.b16 %v113
    %v576 = vunpack.c.h.b16 %v113
    %v577 = vunpack.c.l.b16 %v114
    %v578 = vunpack.c.h.b16 %v114
    %v579 = vunpack.c.l.b16 %v115
    %v580 = vunpack.c.h.b16 %v115
    %v581 = vunpack.c.l.b16 %v116
    %v582 = vunpack.c.h.b16 %v116
    %v583 = vunpack.c.l.b16 %v117
    %v584 = vunpack.c.h.b16 %v117
    %v585 = vunpack.c.l.b16 %v118
    %v586 = vunpack.c.h.b16 %v118
    %v587 = vunpack.c.l.b16 %v119
    %v588 = vunpack.c.h.b16 %v119
    %v589 = vunpack.c.l.b16 %v120
    %v590 = vunpack.c.h.b16 %v120
    %v591 = vunpack.c.l.b16 %v121
    %v592 = vunpack.c.h.b16 %v121
    %v593 = vunpack.c.l.b16 %v122
    %v594 = vunpack.c.h.b16 %v122
    %v595 = vunpack.c.l.b16 %v123
    %v596 = vunpack.c.h.b16 %v123
    %v597 = vunpack.c.l.b16 %v124
    %v598 = vunpack.c.h.b16 %v124
    %v599 = vunpack.c.l.b16 %v125
    %v600 = vunpack.c.h.b16 %v125
    %v601 = vunpack.c.l.b16 %v126
    %v602 = vunpack.c.h.b16 %v126
    %v603 = vunpack.c.l.b16 %v127
    %v604 = vunpack.c.h.b16 %v127
    %v605 = vunpack.c.l.b16 %v128
    %v606 = vunpack.c.h.b16 %v128
    %v607 = vunpack.c.l.b16 %v129
    %v608 = vunpack.c.h.b16 %v129
    %v609 = vunpack.c.l.b16 %v130
    %v610 = vunpack.c.h.b16 %v130
    %v611 = vunpack.c.l.b16 %v131
    %v612 = vunpack.c.h.b16 %v131
    %v613 = vunpack.c.l.b16 %v132
    %v614 = vunpack.c.h.b16 %v132
    %v615 = vunpack.c.l.b16 %v133
    %v616 = vunpack.c.h.b16 %v133
    %v617 = vunpack.c.l.b16 %v134
    %v618 = vunpack.c.h.b16 %v134
    %v619 = vunpack.c.l.b16 %v135
    %v620 = vunpack.c.h.b16 %v135
    %v621 = vunpack.c.l.b16 %v136
    %v622 = vunpack.c.h.b16 %v136
    %v623 = vunpack.c.l.b16 %v137
    %v624 = vunpack.c.h.b16 %v137
    %v625 = vunpack.c.l.b16 %v138
    %v626 = vunpack.c.h.b16 %v138
    %v627 = vunpack.c.l.b16 %v139
    %v628 = vunpack.c.h.b16 %v139
    %v629 = vunpack.c.l.b16 %v140
    %v630 = vunpack.c.h.b16 %v140
    %v631 = vunpack.c.l.b16 %v141
    %v632 = vunpack.c.h.b16 %v141
    %v633 = vunpack.c.l.b16 %v142
    %v634 = vunpack.c.h.b16 %v142
    %v635 = vunpack.c.l.b16 %v143
    %v636 = vunpack.c.h.b16 %v143
    %v637 = vunpack.c.l.b16 %v144
    %v638 = vunpack.c.h.b16 %v144
    %v639 = vunpack.c.l.b16 %v145
    %v640 = vunpack.c.h.b16 %v145
    %v641 = vunpack.c.l.b16 %v146
    %v642 = vunpack.c.h.b16 %v146
    %v643 = vunpack.c.l.b16 %v147
    %v644 = vunpack.c.h.b16 %v147
    %v645 = vunpack.c.l.b16 %v148
    %v646 = vunpack.c.h.b16 %v148
    %v647 = vunpack.c.l.b16 %v149
    %v648 = vunpack.c.h.b16 %v149
    %v649 = vunpack.c.l.b16 %v150
    %v650 = vunpack.c.h.b16 %v150
    %v651 = vunpack.c.l.b16 %v151
    %v652 = vunpack.c.h.b16 %v151
    %v653 = vunpack.c.l.b16 %v152
    %v654 = vunpack.c.h.b16 %v152
    %v655 = vunpack.c.l.b16 %v153
    %v656 = vunpack.c.h.b16 %v153
    %v657 = vunpack.c.l.b16 %v154
    %v658 = vunpack.c.h.b16 %v154
    %v659 = vunpack.c.l.b16 %v155
    %v660 = vunpack.c.h.b16 %v155
    %v661 = vunpack.c.l.b16 %v156
    %v662 = vunpack.c.h.b16 %v156
    %v663 = vunpack.c.l.b16 %v157
    %v664 = vunpack.c.h.b16 %v157
    %v665 = vunpack.c.l.b16 %v158
    %v666 = vunpack.c.h.b16 %v158
    %v667 = vunpack.c.l.b16 %v159
    %v668 = vunpack.c.h.b16 %v159
    %v669 = vunpack.c.l.b16 %v160
    %v670 = vunpack.c.h.b16 %v160
    %v671 = vunpack.c.l.b16 %v161
    %v672 = vunpack.c.h.b16 %v161
    %v673 = vunpack.c.l.b16 %v162
    %v674 = vunpack.c.h.b16 %v162
    %v675 = vunpack.c.l.b16 %v163
    %v676 = vunpack.c.h.b16 %v163
    %v677 = vunpack.c.l.b16 %v164
    %v678 = vunpack.c.h.b16 %v164
    %v679 = vunpack.c.l.b16 %v165
    %v680 = vunpack.c.h.b16 %v165
    %v681 = vunpack.c.l.b16 %v166
    %v682 = vunpack.c.h.b16 %v166
    %v683 = vunpack.c.l.b16 %v167
    %v684 = vunpack.c.h.b16 %v167
    %v685 = vunpack.c.l.b16 %v168
    %v686 = vunpack.c.h.b16 %v168
    %v687 = vunpack.c.l.b16 %v169
    %v688 = vunpack.c.h.b16 %v169
    %v689 = vunpack.c.l.b16 %v170
    %v690 = vunpack.c.h.b16 %v170
    %v691 = vunpack.c.l.b16 %v171
    %v692 = vunpack.c.h.b16 %v171
    %v693 = vunpack.c.l.b16 %v172
    %v694 = vunpack.c.h.b16 %v172
    %v695 = vunpack.c.l.b16 %v173
    %v696 = vunpack.c.h.b16 %v173
    %v697 = vunpack.c.l.b16 %v174
    %v698 = vunpack.c.h.b16 %v174
    %v699 = vunpack.c.l.b16 %v175
    %v700 = vunpack.c.h.b16 %v175
    %v701 = vunpack.c.l.b16 %v176
    %v702 = vunpack.c.h.b16 %v176
    %v703 = vunpack.c.l.b16 %v177
    %v704 = vunpack.c.h.b16 %v177
    %v705 = vunpack.c.l.b16 %v178
    %v706 = vunpack.c.h.b16 %v178
    %v707 = vunpack.c.l.b16 %v179
    %v708 = vunpack.c.h.b16 %v179
    %v709 = vunpack.c.l.b16 %v180
    %v710 = vunpack.c.h.b16 %v180
    %v711 = vunpack.c.l.b16 %v181
    %v712 = vunpack.c.h.b16 %v181
    %v713 = vunpack.c.l.b16 %v182
    %v714 = vunpack.c.h.b16 %v182
    %v715 = vunpack.c.l.b16 %v183
    %v716 = vunpack.c.h.b16 %v183
    %v717 = vunpack.c.l.b16 %v184
    %v718 = vunpack.c.h.b16 %v184
    %v719 = vunpack.c.l.b16 %v185
    %v720 = vunpack.c.h.b16 %v185
    %v721 = vunpack.c.l.b16 %v186
    %v722 = vunpack.c.h.b16 %v186
    %v723 = vunpack.c.l.b16 %v187
    %v724 = vunpack.c.h.b16 %v187
    %v725 = vunpack.c.l.b16 %v188
    %v726 = vunpack.c.h.b16 %v188
    %v727 = vunpack.c.l.b16 %v189
    %v728 = vunpack.c.h.b16 %v189
    %v729 = vunpack.c.l.b16 %v190
    %v730 = vunpack.c.h.b16 %v190
    %v731 = vunpack.c.l.b16 %v191
    %v732 = vunpack.c.h.b16 %v191
    %v733 = vunpack.c.l.b16 %v192
    %v734 = vunpack.c.h.b16 %v192
    %v735 = vunpack.c.l.b16 %v193
    %v736 = vunpack.c.h.b16 %v193
    %v737 = vunpack.c.l.b16 %v194
    %v738 = vunpack.c.h.b16 %v194
    %v739 = vunpack.c.l.b16 %v195
    %v740 = vunpack.c.h.b16 %v195
    %v741 = vunpack.c.l.b16 %v196
    %v742 = vunpack.c.h.b16 %v196
    %v743 = vunpack.c.l.b16 %v197
    %v744 = vunpack.c.h.b16 %v197
    %v745 = vunpack.c.l.b16 %v198
    %v746 = vunpack.c.h.b16 %v198
    %v747 = vunpack.c.l.b16 %v199
    %v748 = vunpack.c.h.b16 %v199
    %v749 = vunpack.c.l.b16 %v200
    %v750 = vunpack.c.h.b16 %v200
    %v751 = vunpack.c.l.b16 %v201
    %v752 = vunpack.c.h.b16 %v201
    %v753 = vunpack.c.l.b16 %v202
    %v754 = vunpack.c.h.b16 %v202
    %v755 = vunpack.c.l.b16 %v203
    %v756 = vunpack.c.h.b16 %v203
    %v757 = vunpack.c.l.b16 %v204
    %v758 = vunpack.c.h.b16 %v204
    %v759 = vunpack.c.l.b16 %v205
    %v760 = vunpack.c.h.b16 %v205
    %v761 = vunpack.c.l.b16 %v206
    %v762 = vunpack.c.h.b16 %v206
    %v763 = vunpack.c.l.b16 %v207
    %v764 = vunpack.c.h.b16 %v207
    %v765 = vunpack.c.l.b16 %v208
    %v766 = vunpack.c.h.b16 %v208
    %v767 = vunpack.c.l.b16 %v209
    %v768 = vunpack.c.h.b16 %v209
    %v769 = vunpack.c.l.b16 %v210
    %v770 = vunpack.c.h.b16 %v210
    %v771 = vunpack.c.l.b16 %v211
    %v772 = vunpack.c.h.b16 %v211
    %v773 = vunpack.c.l.b16 %v212
    %v774 = vunpack.c.h.b16 %v212
    %v775 = vunpack.c.l.b16 %v213
    %v776 = vunpack.c.h.b16 %v213
    %v777 = vunpack.c.l.b16 %v214
    %v778 = vunpack.c.h.b16 %v214
    %v779 = vunpack.c.l.b16 %v215
    %v780 = vunpack.c.h.b16 %v215
    %v781 = vunpack.c.l.b16 %v216
    %v782 = vunpack.c.h.b16 %v216
    %v783 = vunpack.c.l.b16 %v217
    %v784 = vunpack.c.h.b16 %v217
    %v785 = vunpack.c.l.b16 %v218
    %v786 = vunpack.c.h.b16 %v218
    %v787 = vunpack.c.l.b16 %v219
    %v788 = vunpack.c.h.b16 %v219
    %v789 = vunpack.c.l.b16 %v220
    %v790 = vunpack.c.h.b16 %v220
    %v791 = vunpack.c.l.b16 %v221
    %v792 = vunpack.c.h.b16 %v221
    %v793 = vunpack.c.l.b16 %v222
    %v794 = vunpack.c.h.b16 %v222
    %v795 = vunpack.c.l.b16 %v223
    %v796 = vunpack.c.h.b16 %v223
    %v797 = vunpack.c.l.b16 %v224
    %v798 = vunpack.c.h.b16 %v224
    %v799 = vunpack.c.l.b16 %v225
    %v800 = vunpack.c.h.b16 %v225
    %v801 = vunpack.c.l.b16 %v226
    %v802 = vunpack.c.h.b16 %v226
    %v803 = vunpack.c.l.b16 %v227
    %v804 = vunpack.c.h.b16 %v227
    %v805 = vunpack.c.l.b16 %v228
    %v806 = vunpack.c.h.b16 %v228
    %v807 = vunpack.c.l.b16 %v229
    %v808 = vunpack.c.h.b16 %v229
    %v809 = vunpack.c.l.b16 %v230
    %v810 = vunpack.c.h.b16 %v230
    %v811 = vunpack.c.l.b16 %v231
    %v812 = vunpack.c.h.b16 %v231
    %v813 = vunpack.c.l.b16 %v232
    %v814 = vunpack.c.h.b16 %v232
    %v815 = vunpack.c.l.b16 %v233
    %v816 = vunpack.c.h.b16 %v233
    %v817 = vunpack.c.l.b16 %v234
    %v818 = vunpack.c.h.b16 %v234
    %v819 = vunpack.c.l.b16 %v235
    %v820 = vunpack.c.h.b16 %v235
    %v821 = vunpack.c.l.b16 %v236
    %v822 = vunpack.c.h.b16 %v236
    %v823 = vunpack.c.l.b16 %v237
    %v824 = vunpack.c.h.b16 %v237
    %v825 = vunpack.c.l.b16 %v238
    %v826 = vunpack.c.h.b16 %v238
    %v827 = vunpack.c.l.b16 %v239
    %v828 = vunpack.c.h.b16 %v239
    %v829 = vunpack.c.l.b16 %v240
    %v830 = vunpack.c.h.b16 %v240
    %v831 = vunpack.c.l.b16 %v241
    %v832 = vunpack.c.h.b16 %v241
    %v833 = vunpack.c.l.b16 %v242
    %v834 = vunpack.c.h.b16 %v242
    %v835 = vunpack.c.l.b16 %v243
    %v836 = vunpack.c.h.b16 %v243
    %v837 = vunpack.c.l.b16 %v244
    %v838 = vunpack.c.h.b16 %v244
    %v839 = vunpack.c.l.b16 %v245
    %v840 = vunpack.c.h.b16 %v245
    %v841 = vunpack.c.l.b16 %v246
    %v842 = vunpack.c.h.b16 %v246
    %v843 = vunpack.c.l.b16 %v247
    %v844 = vunpack.c.h.b16 %v247
    %v845 = vunpack.c.l.b16 %v248
    %v846 = vunpack.c.h.b16 %v248
    %v847 = vunpack.c.l.b16 %v249
    %v848 = vunpack.c.h.b16 %v249
    %v849 = vunpack.c.l.b16 %v250
    %v850 = vunpack.c.h.b16 %v250
    %v851 = vunpack.c.l.b16 %v251
    %v852 = vunpack.c.h.b16 %v251
    %v853 = vunpack.c.l.b16 %v252
    %v854 = vunpack.c.h.b16 %v252
    %v855 = vunpack.c.l.b16 %v253
    %v856 = vunpack.c.h.b16 %v253
    %v857 = vunpack.c.l.b16 %v254
    %v858 = vunpack.c.h.b16 %v254
    %v859 = vunpack.c.l.b16 %v255
    %v860 = vunpack.c.h.b16 %v255
    %v861 = vunpack.c.l.b16 %v256
    %v862 = vunpack.c.h.b16 %v256
    %v863 = vunpack.c.l.b16 %v257
    %v864 = vunpack.c.h.b16 %v257
    %v865 = vpack.c.b16 %v485, %v481
    %v866 = vpack.c.b16 %v486, %v482
    %v867 = vpack.c.b16 %v487, %v483
    %v868 = vpack.c.b16 %v488, %v484
    %v869 = vpack.c.b16 %v493, %v489
    %v870 = vpack.c.b16 %v494, %v490
    %v871 = vpack.c.b16 %v495, %v491
    %v872 = vpack.c.b16 %v496, %v492
    %v873 = vpack.c.b16 %v501, %v497
    %v874 = vpack.c.b16 %v502, %v498
    %v875 = vpack.c.b16 %v503, %v499
    %v876 = vpack.c.b16 %v504, %v500
    %v877 = vpack.c.b16 %v509, %v505
    %v878 = vpack.c.b16 %v510, %v506
    %v879 = vpack.c.b16 %v511, %v507
    %v880 = vpack.c.b16 %v512, %v508
    %v881 = vpack.c.b16 %v517, %v513
    %v882 = vpack.c.b16 %v518, %v514
    %v883 = vpack.c.b16 %v519, %v515
    %v884 = vpack.c.b16 %v520, %v516
    %v885 = vpack.c.b16 %v525, %v521
    %v886 = vpack.c.b16 %v526, %v522
    %v887 = vpack.c.b16 %v527, %v523
    %v888 = vpack.c.b16 %v528, %v524
    %v889 = vpack.c.b16 %v533, %v529
    %v890 = vpack.c.b16 %v534, %v530
    %v891 = vpack.c.b16 %v535, %v531
    %v892 = vpack.c.b16 %v536, %v532
    %v893 = vpack.c.b16 %v541, %v537
    %v894 = vpack.c.b16 %v542, %v538
    %v895 = vpack.c.b16 %v543, %v539
    %v896 = vpack.c.b16 %v544, %v540
    %v897 = vpack.c.b16 %v549, %v545
    %v898 = vpack.c.b16 %v550, %v546
    %v899 = vpack.c.b16 %v551, %v547
    %v900 = vpack.c.b16 %v552, %v548
    %v901 = vpack.c.b16 %v557, %v553
    %v902 = vpack.c.b16 %v558, %v554
    %v903 = vpack.c.b16 %v559, %v555
    %v904 = vpack.c.b16 %v560, %v556
    %v905 = vpack.c.b16 %v565, %v561
    %v906 = vpack.c.b16 %v566, %v562
    %v907 = vpack.c.b16 %v567, %v563
    %v908 = vpack.c.b16 %v568, %v564
    %v909 = vpack.c.b16 %v573, %v569
    %v910 = vpack.c.b16 %v574, %v570
    %v911 = vpack.c.b16 %v575, %v571
    %v912 = vpack.c.b16 %v576, %v572
    %v913 = vpack.c.b16 %v581, %v577
    %v914 = vpack.c.b16 %v582, %v578
    %v915 = vpack.c.b16 %v583, %v579
    %v916 = vpack.c.b16 %v584, %v580
    %v917 = vpack.c.b16 %v589, %v585
    %v918 = vpack.c.b16 %v590, %v586
    %v919 = vpack.c.b16 %v591, %v587
    %v920 = vpack.c.b16 %v592, %v588
    %v921 = vpack.c.b16 %v597, %v593
    %v922 = vpack.c.b16 %v598, %v594
    %v923 = vpack.c.b16 %v599, %v595
    %v924 = vpack.c.b16 %v600, %v596
    %v925 = vpack.c.b16 %v605, %v601
    %v926 = vpack.c.b16 %v606, %v602
    %v927 = vpack.c.b16 %v607, %v603
    %v928 = vpack.c.b16 %v608, %v604
    %v929 = vpack.c.b16 %v613, %v609
    %v930 = vpack.c.b16 %v614, %v610
    %v931 = vpack.c.b16 %v615, %v611
    %v932 = vpack.c.b16 %v616, %v612
    %v933 = vpack.c.b16 %v621, %v617
    %v934 = vpack.c.b16 %v622, %v618
    %v935 = vpack.c.b16 %v623, %v619
    %v936 = vpack.c.b16 %v624, %v620
    %v937 = vpack.c.b16 %v629, %v625
    %v938 = vpack.c.b16 %v630, %v626
    %v939 = vpack.c.b16 %v631, %v627
    %v940 = vpack.c.b16 %v632, %v628
    %v941 = vpack.c.b16 %v637, %v633
    %v942 = vpack.c.b16 %v638, %v634
    %v943 = vpack.c.b16 %v639, %v635
    %v944 = vpack.c.b16 %v640, %v636
    %v945 = vpack.c.b16 %v645, %v641
    %v946 = vpack.c.b16 %v646, %v642
    %v947 = vpack.c.b16 %v647, %v643
    %v948 = vpack.c.b16 %v648, %v644
    %v949 = vpack.c.b16 %v653, %v649
    %v950 = vpack.c.b16 %v654, %v650
    %v951 = vpack.c.b16 %v655, %v651
    %v952 = vpack.c.b16 %v656, %v652
    %v953 = vpack.c.b16 %v661, %v657
    %v954 = vpack.c.b16 %v662, %v658
    %v955 = vpack.c.b16 %v663, %v659
    %v956 = vpack.c.b16 %v664, %v660
    %v957 = vpack.c.b16 %v669, %v665
    %v958 = vpack.c.b16 %v670, %v666
    %v959 = vpack.c.b16 %v671, %v667
    %v960 = vpack.c.b16 %v672, %v668
    %v961 = vpack.c.b16 %v677, %v673
    %v962 = vpack.c.b16 %v678, %v674
    %v963 = vpack.c.b16 %v679, %v675
    %v964 = vpack.c.b16 %v680, %v676
    %v965 = vpack.c.b16 %v685, %v681
    %v966 = vpack.c.b16 %v686, %v682
    %v967 = vpack.c.b16 %v687, %v683
    %v968 = vpack.c.b16 %v688, %v684
    %v969 = vpack.c.b16 %v693, %v689
    %v970 = vpack.c.b16 %v694, %v690
    %v971 = vpack.c.b16 %v695, %v691
    %v972 = vpack.c.b16 %v696, %v692
    %v973 = vpack.c.b16 %v701, %v697
    %v974 = vpack.c.b16 %v702, %v698
    %v975 = vpack.c.b16 %v703, %v699
    %v976 = vpack.c.b16 %v704, %v700
    %v977 = vpack.c.b16 %v709, %v705
    %v978 = vpack.c.b16 %v710, %v706
    %v979 = vpack.c.b16 %v711, %v707
    %v980 = vpack.c.b16 %v712, %v708
    %v981 = vpack.c.b16 %v717, %v713
    %v982 = vpack.c.b16 %v718, %v714
    %v983 = vpack.c.b16 %v719, %v715
    %v984 = vpack.c.b16 %v720, %v716
    %v985 = vpack.c.b16 %v725, %v721
    %v986 = vpack.c.b16 %v726, %v722
    %v987 = vpack.c.b16 %v727, %v723
    %v988 = vpack.c.b16 %v728, %v724
    %v989 = vpack.c.b16 %v733, %v729
    %v990 = vpack.c.b16 %v734, %v730
    %v991 = vpack.c.b16 %v735, %v731
    %v992 = vpack.c.b16 %v736, %v732
    %v993 = vpack.c.b16 %v741, %v737
    %v994 = vpack.c.b16 %v742, %v738
    %v995 = vpack.c.b16 %v743, %v739
    %v996 = vpack.c.b16 %v744, %v740
    %v997 = vpack.c.b16 %v749, %v745
    %v998 = vpack.c.b16 %v750, %v746
    %v999 = vpack.c.b16 %v751, %v747
    %v1000 = vpack.c.b16 %v752, %v748
    %v1001 = vpack.c.b16 %v757, %v753
    %v1002 = vpack.c.b16 %v758, %v754
    %v1003 = vpack.c.b16 %v759, %v755
    %v1004 = vpack.c.b16 %v760, %v756
    %v1005 = vpack.c.b16 %v765, %v761
    %v1006 = vpack.c.b16 %v766, %v762
    %v1007 = vpack.c.b16 %v767, %v763
    %v1008 = vpack.c.b16 %v768, %v764
    %v1009 = vpack.c.b16 %v773, %v769
    %v1010 = vpack.c.b16 %v774, %v770
    %v1011 = vpack.c.b16 %v775, %v771
    %v1012 = vpack.c.b16 %v776, %v772
    %v1013 = vpack.c.b16 %v781, %v777
    %v1014 = vpack.c.b16 %v782, %v778
    %v1015 = vpack.c.b16 %v783, %v779
    %v1016 = vpack.c.b16 %v784, %v780
    %v1017 = vpack.c.b16 %v789, %v785
    %v1018 = vpack.c.b16 %v790, %v786
    %v1019 = vpack.c.b16 %v791, %v787
    %v1020 = vpack.c.b16 %v792, %v788
    %v1021 = vpack.c.b16 %v797, %v793
    %v1022 = vpack.c.b16 %v798, %v794
    %v1023 = vpack.c.b16 %v799, %v795
    %v1024 = vpack.c.b16 %v800, %v796
    %v1025 = vpack.c.b16 %v805, %v801
    %v1026 = vpack.c.b16 %v806, %v802
    %v1027 = vpack.c.b16 %v807, %v803
    %v1028 = vpack.c.b16 %v808, %v804
    %v1029 = vpack.c.b16 %v813, %v809
    %v1030 = vpack.c.b16 %v814, %v810
    %v1031 = vpack.c.b16 %v815, %v811
    %v1032 = vpack.c.b16 %v816, %v812
    %v1033 = vpack.c.b16 %v821, %v817
    %v1034 = vpack.c.b16 %v822, %v818
    %v1035 = vpack.c.b16 %v823, %v819
    %v1036 = vpack.c.b16 %v824, %v820
    %v1037 = vpack.c.b16 %v829, %v825
    %v1038 = vpack.c.b16 %v830, %v826
    %v1039 = vpack.c.b16 %v831, %v827
    %v1040 = vpack.c.b16 %v832, %v828
    %v1041 = vpack.c.b16 %v837, %v833
    %v1042 = vpack.c.b16 %v838, %v834
    %v1043 = vpack.c.b16 %v839, %v835
    %v1044 = vpack.c.b16 %v840, %v836
    %v1045 = vpack.c.b16 %v845, %v841
    %v1046 = vpack.c.b16 %v846, %v842
    %v1047 = vpack.c.b16 %v847, %v843
    %v1048 = vpack.c.b16 %v848, %v844
    %v1049 = vpack.c.b16 %v853, %v849
    %v1050 = vpack.c.b16 %v854, %v850
    %v1051 = vpack.c.b16 %v855, %v851
    %v1052 = vpack.c.b16 %v856, %v852
    %v1053 = vpack.c.b16 %v861, %v857
    %v1054 = vpack.c.b16 %v862, %v858
    %v1055 = vpack.c.b16 %v863, %v859
    %v1056 = vpack.c.b16 %v864, %v860
    %1249 = vmatpush.bf16.msra.mxu0 %v893
    %1250 = vmatpush.bf16.msra.mxu0 %v889
    %1251 = vmatpush.bf16.msra.mxu0 %v885
    %1252 = vmatpush.bf16.msra.mxu0 %v881
    %1253 = vmatpush.bf16.msra.mxu0 %v877
    %1254 = vmatpush.bf16.msra.mxu0 %v873
    %1255 = vmatpush.bf16.msra.mxu0 %v869
    %1256 = vmatpush.bf16.msra.mxu0 %v865
    %1257 = vmatmul.bf16.gmra.mxu0 %v277
    %v1258 = vpop.f32.mrf.mxu0
    %v1259 = vadd.f32 %v260, %v1258
    %v1260 = vpop.f32.mrf.mxu0
    %1261 = vdwg.mxu0
    %1262 = vmatpush.bf16.msra.mxu0 %v925
    %1263 = vmatpush.bf16.msra.mxu0 %v921
    %1264 = vmatpush.bf16.msra.mxu0 %v917
    %1265 = vmatpush.bf16.msra.mxu0 %v913
    %1266 = vmatpush.bf16.msra.mxu0 %v909
    %1267 = vmatpush.bf16.msra.mxu0 %v905
    %1268 = vmatpush.bf16.msra.mxu0 %v901
    %1269 = vmatpush.bf16.msra.mxu0 %v897
    %1270 = vmatmul.bf16.gmra.mxu0 %v278
    %v1271 = vpop.f32.mrf.mxu0
    %v1272 = vadd.f32 %v1259, %v1271
    %v1273 = vpop.f32.mrf.mxu0
    %1274 = vdwg.mxu0
    %1275 = vmatpush.bf16.msra.mxu0 %v957
    %1276 = vmatpush.bf16.msra.mxu0 %v953
    %1277 = vmatpush.bf16.msra.mxu0 %v949
    %1278 = vmatpush.bf16.msra.mxu0 %v945
    %1279 = vmatpush.bf16.msra.mxu0 %v941
    %1280 = vmatpush.bf16.msra.mxu0 %v937
    %1281 = vmatpush.bf16.msra.mxu0 %v933
    %1282 = vmatpush.bf16.msra.mxu0 %v929
    %1283 = vmatmul.bf16.gmra.mxu0 %v279
    %v1284 = vpop.f32.mrf.mxu0
    %v1285 = vadd.f32 %v1272, %v1284
    %v1286 = vpop.f32.mrf.mxu0
    %1287 = vdwg.mxu0
    %1288 = vmatpush.bf16.msra.mxu0 %v989
    %1289 = vmatpush.bf16.msra.mxu0 %v985
    %1290 = vmatpush.bf16.msra.mxu0 %v981
    %1291 = vmatpush.bf16.msra.mxu0 %v977
    %1292 = vmatpush.bf16.msra.mxu0 %v973
    %1293 = vmatpush.bf16.msra.mxu0 %v969
    %1294 = vmatpush.bf16.msra.mxu0 %v965
    %1295 = vmatpush.bf16.msra.mxu0 %v961
    %1296 = vmatmul.bf16.gmra.mxu0 %v280
    %v1297 = vpop.f32.mrf.mxu0
    %v1298 = vadd.f32 %v1285, %v1297
    %v1299 = vpop.f32.mrf.mxu0
    %1300 = vdwg.mxu0
    %1301 = vmatpush.bf16.msra.mxu0 %v1021
    %1302 = vmatpush.bf16.msra.mxu0 %v1017
    %1303 = vmatpush.bf16.msra.mxu0 %v1013
    %1304 = vmatpush.bf16.msra.mxu0 %v1009
    %1305 = vmatpush.bf16.msra.mxu0 %v1005
    %1306 = vmatpush.bf16.msra.mxu0 %v1001
    %1307 = vmatpush.bf16.msra.mxu0 %v997
    %1308 = vmatpush.bf16.msra.mxu0 %v993
    %1309 = vmatmul.bf16.gmra.mxu0 %v281
    %v1310 = vpop.f32.mrf.mxu0
    %v1311 = vadd.f32 %v1298, %v1310
    %v1312 = vpop.f32.mrf.mxu0
    %1313 = vdwg.mxu0
    %1314 = vmatpush.bf16.msra.mxu0 %v1053
    %1315 = vmatpush.bf16.msra.mxu0 %v1049
    %1316 = vmatpush.bf16.msra.mxu0 %v1045
    %1317 = vmatpush.bf16.msra.mxu0 %v1041
    %1318 = vmatpush.bf16.msra.mxu0 %v1037
    %1319 = vmatpush.bf16.msra.mxu0 %v1033
    %1320 = vmatpush.bf16.msra.mxu0 %v1029
    %1321 = vmatpush.bf16.msra.mxu0 %v1025
    %1322 = vmatmul.bf16.gmra.mxu0 %v282
    %v1323 = vpop.f32.mrf.mxu0
    %v1324 = vadd.f32 %v1311, %v1323
    %v1325 = vpop.f32.mrf.mxu0
    %1326 = vdwg.mxu0
    %1327 = vmatpush.bf16.msra.mxu0 %v894
    %1328 = vmatpush.bf16.msra.mxu0 %v890
    %1329 = vmatpush.bf16.msra.mxu0 %v886
    %1330 = vmatpush.bf16.msra.mxu0 %v882
    %1331 = vmatpush.bf16.msra.mxu0 %v878
    %1332 = vmatpush.bf16.msra.mxu0 %v874
    %1333 = vmatpush.bf16.msra.mxu0 %v870
    %1334 = vmatpush.bf16.msra.mxu0 %v866
    %1335 = vmatmul.bf16.gmra.mxu0 %v277
    %v1336 = vpop.f32.mrf.mxu0
    %v1337 = vadd.f32 %v261, %v1336
    %v1338 = vpop.f32.mrf.mxu0
    %1339 = vdwg.mxu0
    %1340 = vmatpush.bf16.msra.mxu0 %v926
    %1341 = vmatpush.bf16.msra.mxu0 %v922
    %1342 = vmatpush.bf16.msra.mxu0 %v918
    %1343 = vmatpush.bf16.msra.mxu0 %v914
    %1344 = vmatpush.bf16.msra.mxu0 %v910
    %1345 = vmatpush.bf16.msra.mxu0 %v906
    %1346 = vmatpush.bf16.msra.mxu0 %v902
    %1347 = vmatpush.bf16.msra.mxu0 %v898
    %1348 = vmatmul.bf16.gmra.mxu0 %v278
    %v1349 = vpop.f32.mrf.mxu0
    %v1350 = vadd.f32 %v1337, %v1349
    %v1351 = vpop.f32.mrf.mxu0
    %1352 = vdwg.mxu0
    %1353 = vmatpush.bf16.msra.mxu0 %v958
    %1354 = vmatpush.bf16.msra.mxu0 %v954
    %1355 = vmatpush.bf16.msra.mxu0 %v950
    %1356 = vmatpush.bf16.msra.mxu0 %v946
    %1357 = vmatpush.bf16.msra.mxu0 %v942
    %1358 = vmatpush.bf16.msra.mxu0 %v938
    %1359 = vmatpush.bf16.msra.mxu0 %v934
    %1360 = vmatpush.bf16.msra.mxu0 %v930
    %1361 = vmatmul.bf16.gmra.mxu0 %v279
    %v1362 = vpop.f32.mrf.mxu0
    %v1363 = vadd.f32 %v1350, %v1362
    %v1364 = vpop.f32.mrf.mxu0
    %1365 = vdwg.mxu0
    %1366 = vmatpush.bf16.msra.mxu0 %v990
    %1367 = vmatpush.bf16.msra.mxu0 %v986
    %1368 = vmatpush.bf16.msra.mxu0 %v982
    %1369 = vmatpush.bf16.msra.mxu0 %v978
    %1370 = vmatpush.bf16.msra.mxu0 %v974
    %1371 = vmatpush.bf16.msra.mxu0 %v970
    %1372 = vmatpush.bf16.msra.mxu0 %v966
    %1373 = vmatpush.bf16.msra.mxu0 %v962
    %1374 = vmatmul.bf16.gmra.mxu0 %v280
    %v1375 = vpop.f32.mrf.mxu0
    %v1376 = vadd.f32 %v1363, %v1375
    %v1377 = vpop.f32.mrf.mxu0
    %1378 = vdwg.mxu0
    %1379 = vmatpush.bf16.msra.mxu0 %v1022
    %1380 = vmatpush.bf16.msra.mxu0 %v1018
    %1381 = vmatpush.bf16.msra.mxu0 %v1014
    %1382 = vmatpush.bf16.msra.mxu0 %v1010
    %1383 = vmatpush.bf16.msra.mxu0 %v1006
    %1384 = vmatpush.bf16.msra.mxu0 %v1002
    %1385 = vmatpush.bf16.msra.mxu0 %v998
    %1386 = vmatpush.bf16.msra.mxu0 %v994
    %1387 = vmatmul.bf16.gmra.mxu0 %v281
    %v1388 = vpop.f32.mrf.mxu0
    %v1389 = vadd.f32 %v1376, %v1388
    %v1390 = vpop.f32.mrf.mxu0
    %1391 = vdwg.mxu0
    %1392 = vmatpush.bf16.msra.mxu0 %v1054
    %1393 = vmatpush.bf16.msra.mxu0 %v1050
    %1394 = vmatpush.bf16.msra.mxu0 %v1046
    %1395 = vmatpush.bf16.msra.mxu0 %v1042
    %1396 = vmatpush.bf16.msra.mxu0 %v1038
    %1397 = vmatpush.bf16.msra.mxu0 %v1034
    %1398 = vmatpush.bf16.msra.mxu0 %v1030
    %1399 = vmatpush.bf16.msra.mxu0 %v1026
    %1400 = vmatmul.bf16.gmra.mxu0 %v282
    %v1401 = vpop.f32.mrf.mxu0
    %v1402 = vadd.f32 %v1389, %v1401
    %v1403 = vpop.f32.mrf.mxu0
    %1404 = vdwg.mxu0
    %1405 = vmatpush.bf16.msra.mxu0 %v895
    %1406 = vmatpush.bf16.msra.mxu0 %v891
    %1407 = vmatpush.bf16.msra.mxu0 %v887
    %1408 = vmatpush.bf16.msra.mxu0 %v883
    %1409 = vmatpush.bf16.msra.mxu0 %v879
    %1410 = vmatpush.bf16.msra.mxu0 %v875
    %1411 = vmatpush.bf16.msra.mxu0 %v871
    %1412 = vmatpush.bf16.msra.mxu0 %v867
    %1413 = vmatmul.bf16.gmra.mxu0 %v277
    %v1414 = vpop.f32.mrf.mxu0
    %v1415 = vadd.f32 %v262, %v1414
    %v1416 = vpop.f32.mrf.mxu0
    %1417 = vdwg.mxu0
    %1418 = vmatpush.bf16.msra.mxu0 %v927
    %1419 = vmatpush.bf16.msra.mxu0 %v923
    %1420 = vmatpush.bf16.msra.mxu0 %v919
    %1421 = vmatpush.bf16.msra.mxu0 %v915
    %1422 = vmatpush.bf16.msra.mxu0 %v911
    %1423 = vmatpush.bf16.msra.mxu0 %v907
    %1424 = vmatpush.bf16.msra.mxu0 %v903
    %1425 = vmatpush.bf16.msra.mxu0 %v899
    %1426 = vmatmul.bf16.gmra.mxu0 %v278
    %v1427 = vpop.f32.mrf.mxu0
    %v1428 = vadd.f32 %v1415, %v1427
    %v1429 = vpop.f32.mrf.mxu0
    %1430 = vdwg.mxu0
    %1431 = vmatpush.bf16.msra.mxu0 %v959
    %1432 = vmatpush.bf16.msra.mxu0 %v955
    %1433 = vmatpush.bf16.msra.mxu0 %v951
    %1434 = vmatpush.bf16.msra.mxu0 %v947
    %1435 = vmatpush.bf16.msra.mxu0 %v943
    %1436 = vmatpush.bf16.msra.mxu0 %v939
    %1437 = vmatpush.bf16.msra.mxu0 %v935
    %1438 = vmatpush.bf16.msra.mxu0 %v931
    %1439 = vmatmul.bf16.gmra.mxu0 %v279
    %v1440 = vpop.f32.mrf.mxu0
    %v1441 = vadd.f32 %v1428, %v1440
    %v1442 = vpop.f32.mrf.mxu0
    %1443 = vdwg.mxu0
    %1444 = vmatpush.bf16.msra.mxu0 %v991
    %1445 = vmatpush.bf16.msra.mxu0 %v987
    %1446 = vmatpush.bf16.msra.mxu0 %v983
    %1447 = vmatpush.bf16.msra.mxu0 %v979
    %1448 = vmatpush.bf16.msra.mxu0 %v975
    %1449 = vmatpush.bf16.msra.mxu0 %v971
    %1450 = vmatpush.bf16.msra.mxu0 %v967
    %1451 = vmatpush.bf16.msra.mxu0 %v963
    %1452 = vmatmul.bf16.gmra.mxu0 %v280
    %v1453 = vpop.f32.mrf.mxu0
    %v1454 = vadd.f32 %v1441, %v1453
    %v1455 = vpop.f32.mrf.mxu0
    %1456 = vdwg.mxu0
    %1457 = vmatpush.bf16.msra.mxu0 %v1023
    %1458 = vmatpush.bf16.msra.mxu0 %v1019
    %1459 = vmatpush.bf16.msra.mxu0 %v1015
    %1460 = vmatpush.bf16.msra.mxu0 %v1011
    %1461 = vmatpush.bf16.msra.mxu0 %v1007
    %1462 = vmatpush.bf16.msra.mxu0 %v1003
    %1463 = vmatpush.bf16.msra.mxu0 %v999
    %1464 = vmatpush.bf16.msra.mxu0 %v995
    %1465 = vmatmul.bf16.gmra.mxu0 %v281
    %v1466 = vpop.f32.mrf.mxu0
    %v1467 = vadd.f32 %v1454, %v1466
    %v1468 = vpop.f32.mrf.mxu0
    %1469 = vdwg.mxu0
    %1470 = vmatpush.bf16.msra.mxu0 %v1055
    %1471 = vmatpush.bf16.msra.mxu0 %v1051
    %1472 = vmatpush.bf16.msra.mxu0 %v1047
    %1473 = vmatpush.bf16.msra.mxu0 %v1043
    %1474 = vmatpush.bf16.msra.mxu0 %v1039
    %1475 = vmatpush.bf16.msra.mxu0 %v1035
    %1476 = vmatpush.bf16.msra.mxu0 %v1031
    %1477 = vmatpush.bf16.msra.mxu0 %v1027
    %1478 = vmatmul.bf16.gmra.mxu0 %v282
    %v1479 = vpop.f32.mrf.mxu0
    %v1480 = vadd.f32 %v1467, %v1479
    %v1481 = vpop.f32.mrf.mxu0
    %1482 = vdwg.mxu0
    %1483 = vmatpush.bf16.msra.mxu0 %v896
    %1484 = vmatpush.bf16.msra.mxu0 %v892
    %1485 = vmatpush.bf16.msra.mxu0 %v888
    %1486 = vmatpush.bf16.msra.mxu0 %v884
    %1487 = vmatpush.bf16.msra.mxu0 %v880
    %1488 = vmatpush.bf16.msra.mxu0 %v876
    %1489 = vmatpush.bf16.msra.mxu0 %v872
    %1490 = vmatpush.bf16.msra.mxu0 %v868
    %1491 = vmatmul.bf16.gmra.mxu0 %v277
    %v1492 = vpop.f32.mrf.mxu0
    %v1493 = vadd.f32 %v263, %v1492
    %v1494 = vpop.f32.mrf.mxu0
    %1495 = vdwg.mxu0
    %1496 = vmatpush.bf16.msra.mxu0 %v928
    %1497 = vmatpush.bf16.msra.mxu0 %v924
    %1498 = vmatpush.bf16.msra.mxu0 %v920
    %1499 = vmatpush.bf16.msra.mxu0 %v916
    %1500 = vmatpush.bf16.msra.mxu0 %v912
    %1501 = vmatpush.bf16.msra.mxu0 %v908
    %1502 = vmatpush.bf16.msra.mxu0 %v904
    %1503 = vmatpush.bf16.msra.mxu0 %v900
    %1504 = vmatmul.bf16.gmra.mxu0 %v278
    %v1505 = vpop.f32.mrf.mxu0
    %v1506 = vadd.f32 %v1493, %v1505
    %v1507 = vpop.f32.mrf.mxu0
    %1508 = vdwg.mxu0
    %1509 = vmatpush.bf16.msra.mxu0 %v960
    %1510 = vmatpush.bf16.msra.mxu0 %v956
    %1511 = vmatpush.bf16.msra.mxu0 %v952
    %1512 = vmatpush.bf16.msra.mxu0 %v948
    %1513 = vmatpush.bf16.msra.mxu0 %v944
    %1514 = vmatpush.bf16.msra.mxu0 %v940
    %1515 = vmatpush.bf16.msra.mxu0 %v936
    %1516 = vmatpush.bf16.msra.mxu0 %v932
    %1517 = vmatmul.bf16.gmra.mxu0 %v279
    %v1518 = vpop.f32.mrf.mxu0
    %v1519 = vadd.f32 %v1506, %v1518
    %v1520 = vpop.f32.mrf.mxu0
    %1521 = vdwg.mxu0
    %1522 = vmatpush.bf16.msra.mxu0 %v992
    %1523 = vmatpush.bf16.msra.mxu0 %v988
    %1524 = vmatpush.bf16.msra.mxu0 %v984
    %1525 = vmatpush.bf16.msra.mxu0 %v980
    %1526 = vmatpush.bf16.msra.mxu0 %v976
    %1527 = vmatpush.bf16.msra.mxu0 %v972
    %1528 = vmatpush.bf16.msra.mxu0 %v968
    %1529 = vmatpush.bf16.msra.mxu0 %v964
    %1530 = vmatmul.bf16.gmra.mxu0 %v280
    %v1531 = vpop.f32.mrf.mxu0
    %v1532 = vadd.f32 %v1519, %v1531
    %v1533 = vpop.f32.mrf.mxu0
    %1534 = vdwg.mxu0
    %1535 = vmatpush.bf16.msra.mxu0 %v1024
    %1536 = vmatpush.bf16.msra.mxu0 %v1020
    %1537 = vmatpush.bf16.msra.mxu0 %v1016
    %1538 = vmatpush.bf16.msra.mxu0 %v1012
    %1539 = vmatpush.bf16.msra.mxu0 %v1008
    %1540 = vmatpush.bf16.msra.mxu0 %v1004
    %1541 = vmatpush.bf16.msra.mxu0 %v1000
    %1542 = vmatpush.bf16.msra.mxu0 %v996
    %1543 = vmatmul.bf16.gmra.mxu0 %v281
    %v1544 = vpop.f32.mrf.mxu0
    %v1545 = vadd.f32 %v1532, %v1544
    %v1546 = vpop.f32.mrf.mxu0
    %1547 = vdwg.mxu0
    %1548 = vmatpush.bf16.msra.mxu0 %v1056
    %1549 = vmatpush.bf16.msra.mxu0 %v1052
    %1550 = vmatpush.bf16.msra.mxu0 %v1048
    %1551 = vmatpush.bf16.msra.mxu0 %v1044
    %1552 = vmatpush.bf16.msra.mxu0 %v1040
    %1553 = vmatpush.bf16.msra.mxu0 %v1036
    %1554 = vmatpush.bf16.msra.mxu0 %v1032
    %1555 = vmatpush.bf16.msra.mxu0 %v1028
    %1556 = vmatmul.bf16.gmra.mxu0 %v282
    %v1557 = vpop.f32.mrf.mxu0
    %v1558 = vadd.f32 %v1545, %v1557
    %v1559 = vpop.f32.mrf.mxu0
    %1560 = vdwg.mxu0
    %v1561 = vmax.f32 %v1324, 0.0
    %v1562 = vmax.f32 %v1402, 0.0
    %v1563 = vmax.f32 %v1480, 0.0
    %v1564 = vmax.f32 %v1558, 0.0
    %v1565 = vpack.c.bf16 %v1561, %v1561
    %v1566 = vpack.c.bf16 %v1562, %v1562
    %v1567 = vpack.c.bf16 %v1563, %v1563
    %v1568 = vpack.c.bf16 %v1564, %v1564
    %v1569 = vld [vmem:[#allocation5] sm:$0xff]
    %v1570 = vld [vmem:[#allocation5 + $0x8] sm:$0xff]
    %v1571 = vld [vmem:[#allocation5 + $0x10] sm:$0xff]
    %v1572 = vld [vmem:[#allocation5 + $0x18] sm:$0xff]
    %v1573 = vld [vmem:[#allocation5 + $0x20] sm:$0xff]
    %v1574 = vld [vmem:[#allocation5 + $0x28] sm:$0xff]
    %v1575 = vld [vmem:[#allocation5 + $0x30] sm:$0xff]
    %v1576 = vld [vmem:[#allocation5 + $0x38] sm:$0xff]
    %v1577 = vld [vmem:[#allocation5 + $0x40] sm:$0xff]
    %v1578 = vld [vmem:[#allocation5 + $0x48] sm:$0xff]
    %v1579 = vld [vmem:[#allocation5 + $0x50] sm:$0xff]
    %v1580 = vld [vmem:[#allocation5 + $0x58] sm:$0xff]
    %v1581 = vld [vmem:[#allocation5 + $0x60] sm:$0xff]
    %v1582 = vld [vmem:[#allocation5 + $0x68] sm:$0xff]
    %v1583 = vld [vmem:[#allocation5 + $0x70] sm:$0xff]
    %v1584 = vld [vmem:[#allocation5 + $0x78] sm:$0xff]
    %v1585 = vld [vmem:[#allocation5 + $0x80] sm:$0xff]
    %v1586 = vld [vmem:[#allocation5 + $0x88] sm:$0xff]
    %v1587 = vld [vmem:[#allocation5 + $0x90] sm:$0xff]
    %v1588 = vld [vmem:[#allocation5 + $0x98] sm:$0xff]
    %v1589 = vld [vmem:[#allocation5 + $0xa0] sm:$0xff]
    %v1590 = vld [vmem:[#allocation5 + $0xa8] sm:$0xff]
    %v1591 = vld [vmem:[#allocation5 + $0xb0] sm:$0xff]
    %v1592 = vld [vmem:[#allocation5 + $0xb8] sm:$0xff]
    %v1593 = vld [vmem:[#allocation5 + $0xc0] sm:$0xff]
    %v1594 = vld [vmem:[#allocation5 + $0xc8] sm:$0xff]
    %v1595 = vld [vmem:[#allocation5 + $0xd0] sm:$0xff]
    %v1596 = vld [vmem:[#allocation5 + $0xd8] sm:$0xff]
    %v1597 = vld [vmem:[#allocation5 + $0xe0] sm:$0xff]
    %v1598 = vld [vmem:[#allocation5 + $0xe8] sm:$0xff]
    %v1599 = vld [vmem:[#allocation5 + $0xf0] sm:$0xff]
    %v1600 = vld [vmem:[#allocation5 + $0xf8] sm:$0xff]
    %v1601 = vld [vmem:[#allocation5 + $0x100] sm:$0xff]
    %v1602 = vld [vmem:[#allocation5 + $0x108] sm:$0xff]
    %v1603 = vld [vmem:[#allocation5 + $0x110] sm:$0xff]
    %v1604 = vld [vmem:[#allocation5 + $0x118] sm:$0xff]
    %v1605 = vld [vmem:[#allocation5 + $0x120] sm:$0xff]
    %v1606 = vld [vmem:[#allocation5 + $0x128] sm:$0xff]
    %v1607 = vld [vmem:[#allocation5 + $0x130] sm:$0xff]
    %v1608 = vld [vmem:[#allocation5 + $0x138] sm:$0xff]
    %v1609 = vld [vmem:[#allocation5 + $0x140] sm:$0xff]
    %v1610 = vld [vmem:[#allocation5 + $0x148] sm:$0xff]
    %v1611 = vld [vmem:[#allocation5 + $0x150] sm:$0xff]
    %v1612 = vld [vmem:[#allocation5 + $0x158] sm:$0xff]
    %v1613 = vld [vmem:[#allocation5 + $0x160] sm:$0xff]
    %v1614 = vld [vmem:[#allocation5 + $0x168] sm:$0xff]
    %v1615 = vld [vmem:[#allocation5 + $0x170] sm:$0xff]
    %v1616 = vld [vmem:[#allocation5 + $0x178] sm:$0xff]
    %v1617 = vld [vmem:[#allocation5 + $0x180] sm:$0xff]
    %v1618 = vld [vmem:[#allocation5 + $0x188] sm:$0xff]
    %v1619 = vld [vmem:[#allocation5 + $0x190] sm:$0xff]
    %v1620 = vld [vmem:[#allocation5 + $0x198] sm:$0xff]
    %v1621 = vld [vmem:[#allocation5 + $0x1a0] sm:$0xff]
    %v1622 = vld [vmem:[#allocation5 + $0x1a8] sm:$0xff]
    %v1623 = vld [vmem:[#allocation5 + $0x1b0] sm:$0xff]
    %v1624 = vld [vmem:[#allocation5 + $0x1b8] sm:$0xff]
    %v1625 = vld [vmem:[#allocation5 + $0x1c0] sm:$0xff]
    %v1626 = vld [vmem:[#allocation5 + $0x1c8] sm:$0xff]
    %v1627 = vld [vmem:[#allocation5 + $0x1d0] sm:$0xff]
    %v1628 = vld [vmem:[#allocation5 + $0x1d8] sm:$0xff]
    %v1629 = vld [vmem:[#allocation5 + $0x1e0] sm:$0xff]
    %v1630 = vld [vmem:[#allocation5 + $0x1e8] sm:$0xff]
    %v1631 = vld [vmem:[#allocation5 + $0x1f0] sm:$0xff]
    %v1632 = vld [vmem:[#allocation5 + $0x1f8] sm:$0xff]
    %v1633 = vld [vmem:[%s4] sm:$0x3]
    %v1635 = vperm.slane %v1633, 0
    %v1636 = vperm.slane %v1633, 1
    %v1703 = vunpack.c.l.b16 %v1569
    %v1704 = vunpack.c.h.b16 %v1569
    %v1705 = vunpack.c.l.b16 %v1570
    %v1706 = vunpack.c.h.b16 %v1570
    %v1707 = vunpack.c.l.b16 %v1571
    %v1708 = vunpack.c.h.b16 %v1571
    %v1709 = vunpack.c.l.b16 %v1572
    %v1710 = vunpack.c.h.b16 %v1572
    %v1711 = vunpack.c.l.b16 %v1573
    %v1712 = vunpack.c.h.b16 %v1573
    %v1713 = vunpack.c.l.b16 %v1574
    %v1714 = vunpack.c.h.b16 %v1574
    %v1715 = vunpack.c.l.b16 %v1575
    %v1716 = vunpack.c.h.b16 %v1575
    %v1717 = vunpack.c.l.b16 %v1576
    %v1718 = vunpack.c.h.b16 %v1576
    %v1719 = vunpack.c.l.b16 %v1577
    %v1720 = vunpack.c.h.b16 %v1577
    %v1721 = vunpack.c.l.b16 %v1578
    %v1722 = vunpack.c.h.b16 %v1578
    %v1723 = vunpack.c.l.b16 %v1579
    %v1724 = vunpack.c.h.b16 %v1579
    %v1725 = vunpack.c.l.b16 %v1580
    %v1726 = vunpack.c.h.b16 %v1580
    %v1727 = vunpack.c.l.b16 %v1581
    %v1728 = vunpack.c.h.b16 %v1581
    %v1729 = vunpack.c.l.b16 %v1582
    %v1730 = vunpack.c.h.b16 %v1582
    %v1731 = vunpack.c.l.b16 %v1583
    %v1732 = vunpack.c.h.b16 %v1583
    %v1733 = vunpack.c.l.b16 %v1584
    %v1734 = vunpack.c.h.b16 %v1584
    %v1735 = vunpack.c.l.b16 %v1585
    %v1736 = vunpack.c.h.b16 %v1585
    %v1737 = vunpack.c.l.b16 %v1586
    %v1738 = vunpack.c.h.b16 %v1586
    %v1739 = vunpack.c.l.b16 %v1587
    %v1740 = vunpack.c.h.b16 %v1587
    %v1741 = vunpack.c.l.b16 %v1588
    %v1742 = vunpack.c.h.b16 %v1588
    %v1743 = vunpack.c.l.b16 %v1589
    %v1744 = vunpack.c.h.b16 %v1589
    %v1745 = vunpack.c.l.b16 %v1590
    %v1746 = vunpack.c.h.b16 %v1590
    %v1747 = vunpack.c.l.b16 %v1591
    %v1748 = vunpack.c.h.b16 %v1591
    %v1749 = vunpack.c.l.b16 %v1592
    %v1750 = vunpack.c.h.b16 %v1592
    %v1751 = vunpack.c.l.b16 %v1593
    %v1752 = vunpack.c.h.b16 %v1593
    %v1753 = vunpack.c.l.b16 %v1594
    %v1754 = vunpack.c.h.b16 %v1594
    %v1755 = vunpack.c.l.b16 %v1595
    %v1756 = vunpack.c.h.b16 %v1595
    %v1757 = vunpack.c.l.b16 %v1596
    %v1758 = vunpack.c.h.b16 %v1596
    %v1759 = vunpack.c.l.b16 %v1597
    %v1760 = vunpack.c.h.b16 %v1597
    %v1761 = vunpack.c.l.b16 %v1598
    %v1762 = vunpack.c.h.b16 %v1598
    %v1763 = vunpack.c.l.b16 %v1599
    %v1764 = vunpack.c.h.b16 %v1599
    %v1765 = vunpack.c.l.b16 %v1600
    %v1766 = vunpack.c.h.b16 %v1600
    %v1767 = vunpack.c.l.b16 %v1601
    %v1768 = vunpack.c.h.b16 %v1601
    %v1769 = vunpack.c.l.b16 %v1602
    %v1770 = vunpack.c.h.b16 %v1602
    %v1771 = vunpack.c.l.b16 %v1603
    %v1772 = vunpack.c.h.b16 %v1603
    %v1773 = vunpack.c.l.b16 %v1604
    %v1774 = vunpack.c.h.b16 %v1604
    %v1775 = vunpack.c.l.b16 %v1605
    %v1776 = vunpack.c.h.b16 %v1605
    %v1777 = vunpack.c.l.b16 %v1606
    %v1778 = vunpack.c.h.b16 %v1606
    %v1779 = vunpack.c.l.b16 %v1607
    %v1780 = vunpack.c.h.b16 %v1607
    %v1781 = vunpack.c.l.b16 %v1608
    %v1782 = vunpack.c.h.b16 %v1608
    %v1783 = vunpack.c.l.b16 %v1609
    %v1784 = vunpack.c.h.b16 %v1609
    %v1785 = vunpack.c.l.b16 %v1610
    %v1786 = vunpack.c.h.b16 %v1610
    %v1787 = vunpack.c.l.b16 %v1611
    %v1788 = vunpack.c.h.b16 %v1611
    %v1789 = vunpack.c.l.b16 %v1612
    %v1790 = vunpack.c.h.b16 %v1612
    %v1791 = vunpack.c.l.b16 %v1613
    %v1792 = vunpack.c.h.b16 %v1613
    %v1793 = vunpack.c.l.b16 %v1614
    %v1794 = vunpack.c.h.b16 %v1614
    %v1795 = vunpack.c.l.b16 %v1615
    %v1796 = vunpack.c.h.b16 %v1615
    %v1797 = vunpack.c.l.b16 %v1616
    %v1798 = vunpack.c.h.b16 %v1616
    %v1799 = vunpack.c.l.b16 %v1617
    %v1800 = vunpack.c.h.b16 %v1617
    %v1801 = vunpack.c.l.b16 %v1618
    %v1802 = vunpack.c.h.b16 %v1618
    %v1803 = vunpack.c.l.b16 %v1619
    %v1804 = vunpack.c.h.b16 %v1619
    %v1805 = vunpack.c.l.b16 %v1620
    %v1806 = vunpack.c.h.b16 %v1620
    %v1807 = vunpack.c.l.b16 %v1621
    %v1808 = vunpack.c.h.b16 %v1621
    %v1809 = vunpack.c.l.b16 %v1622
    %v1810 = vunpack.c.h.b16 %v1622
    %v1811 = vunpack.c.l.b16 %v1623
    %v1812 = vunpack.c.h.b16 %v1623
    %v1813 = vunpack.c.l.b16 %v1624
    %v1814 = vunpack.c.h.b16 %v1624
    %v1815 = vunpack.c.l.b16 %v1625
    %v1816 = vunpack.c.h.b16 %v1625
    %v1817 = vunpack.c.l.b16 %v1626
    %v1818 = vunpack.c.h.b16 %v1626
    %v1819 = vunpack.c.l.b16 %v1627
    %v1820 = vunpack.c.h.b16 %v1627
    %v1821 = vunpack.c.l.b16 %v1628
    %v1822 = vunpack.c.h.b16 %v1628
    %v1823 = vunpack.c.l.b16 %v1629
    %v1824 = vunpack.c.h.b16 %v1629
    %v1825 = vunpack.c.l.b16 %v1630
    %v1826 = vunpack.c.h.b16 %v1630
    %v1827 = vunpack.c.l.b16 %v1631
    %v1828 = vunpack.c.h.b16 %v1631
    %v1829 = vunpack.c.l.b16 %v1632
    %v1830 = vunpack.c.h.b16 %v1632
    %v1831 = vpack.c.b16 %v1705, %v1703
    %v1832 = vpack.c.b16 %v1706, %v1704
    %v1833 = vpack.c.b16 %v1709, %v1707
    %v1834 = vpack.c.b16 %v1710, %v1708
    %v1835 = vpack.c.b16 %v1713, %v1711
    %v1836 = vpack.c.b16 %v1714, %v1712
    %v1837 = vpack.c.b16 %v1717, %v1715
    %v1838 = vpack.c.b16 %v1718, %v1716
    %v1839 = vpack.c.b16 %v1721, %v1719
    %v1840 = vpack.c.b16 %v1722, %v1720
    %v1841 = vpack.c.b16 %v1725, %v1723
    %v1842 = vpack.c.b16 %v1726, %v1724
    %v1843 = vpack.c.b16 %v1729, %v1727
    %v1844 = vpack.c.b16 %v1730, %v1728
    %v1845 = vpack.c.b16 %v1733, %v1731
    %v1846 = vpack.c.b16 %v1734, %v1732
    %v1847 = vpack.c.b16 %v1737, %v1735
    %v1848 = vpack.c.b16 %v1738, %v1736
    %v1849 = vpack.c.b16 %v1741, %v1739
    %v1850 = vpack.c.b16 %v1742, %v1740
    %v1851 = vpack.c.b16 %v1745, %v1743
    %v1852 = vpack.c.b16 %v1746, %v1744
    %v1853 = vpack.c.b16 %v1749, %v1747
    %v1854 = vpack.c.b16 %v1750, %v1748
    %v1855 = vpack.c.b16 %v1753, %v1751
    %v1856 = vpack.c.b16 %v1754, %v1752
    %v1857 = vpack.c.b16 %v1757, %v1755
    %v1858 = vpack.c.b16 %v1758, %v1756
    %v1859 = vpack.c.b16 %v1761, %v1759
    %v1860 = vpack.c.b16 %v1762, %v1760
    %v1861 = vpack.c.b16 %v1765, %v1763
    %v1862 = vpack.c.b16 %v1766, %v1764
    %v1863 = vpack.c.b16 %v1769, %v1767
    %v1864 = vpack.c.b16 %v1770, %v1768
    %v1865 = vpack.c.b16 %v1773, %v1771
    %v1866 = vpack.c.b16 %v1774, %v1772
    %v1867 = vpack.c.b16 %v1777, %v1775
    %v1868 = vpack.c.b16 %v1778, %v1776
    %v1869 = vpack.c.b16 %v1781, %v1779
    %v1870 = vpack.c.b16 %v1782, %v1780
    %v1871 = vpack.c.b16 %v1785, %v1783
    %v1872 = vpack.c.b16 %v1786, %v1784
    %v1873 = vpack.c.b16 %v1789, %v1787
    %v1874 = vpack.c.b16 %v1790, %v1788
    %v1875 = vpack.c.b16 %v1793, %v1791
    %v1876 = vpack.c.b16 %v1794, %v1792
    %v1877 = vpack.c.b16 %v1797, %v1795
    %v1878 = vpack.c.b16 %v1798, %v1796
    %v1879 = vpack.c.b16 %v1801, %v1799
    %v1880 = vpack.c.b16 %v1802, %v1800
    %v1881 = vpack.c.b16 %v1805, %v1803
    %v1882 = vpack.c.b16 %v1806, %v1804
    %v1883 = vpack.c.b16 %v1809, %v1807
    %v1884 = vpack.c.b16 %v1810, %v1808
    %v1885 = vpack.c.b16 %v1813, %v1811
    %v1886 = vpack.c.b16 %v1814, %v1812
    %v1887 = vpack.c.b16 %v1817, %v1815
    %v1888 = vpack.c.b16 %v1818, %v1816
    %v1889 = vpack.c.b16 %v1821, %v1819
    %v1890 = vpack.c.b16 %v1822, %v1820
    %v1891 = vpack.c.b16 %v1825, %v1823
    %v1892 = vpack.c.b16 %v1826, %v1824
    %v1893 = vpack.c.b16 %v1829, %v1827
    %v1894 = vpack.c.b16 %v1830, %v1828
    %1959 = vmatpush.bf16.msra.mxu0 %v1845
    %1960 = vmatpush.bf16.msra.mxu0 %v1843
    %1961 = vmatpush.bf16.msra.mxu0 %v1841
    %1962 = vmatpush.bf16.msra.mxu0 %v1839
    %1963 = vmatpush.bf16.msra.mxu0 %v1837
    %1964 = vmatpush.bf16.msra.mxu0 %v1835
    %1965 = vmatpush.bf16.msra.mxu0 %v1833
    %1966 = vmatpush.bf16.msra.mxu0 %v1831
    %1967 = vmatmul.bf16.gmra.mxu0 %v1565
    %v1968 = vpop.f32.mrf.mxu0
    %v1969 = vadd.f32 %v1635, %v1968
    %v1970 = vpop.f32.mrf.mxu0
    %1971 = vdwg.mxu0
    %1972 = vmatpush.bf16.msra.mxu0 %v1861
    %1973 = vmatpush.bf16.msra.mxu0 %v1859
    %1974 = vmatpush.bf16.msra.mxu0 %v1857
    %1975 = vmatpush.bf16.msra.mxu0 %v1855
    %1976 = vmatpush.bf16.msra.mxu0 %v1853
    %1977 = vmatpush.bf16.msra.mxu0 %v1851
    %1978 = vmatpush.bf16.msra.mxu0 %v1849
    %1979 = vmatpush.bf16.msra.mxu0 %v1847
    %1980 = vmatmul.bf16.gmra.mxu0 %v1566
    %v1981 = vpop.f32.mrf.mxu0
    %v1982 = vadd.f32 %v1969, %v1981
    %v1983 = vpop.f32.mrf.mxu0
    %1984 = vdwg.mxu0
    %1985 = vmatpush.bf16.msra.mxu0 %v1877
    %1986 = vmatpush.bf16.msra.mxu0 %v1875
    %1987 = vmatpush.bf16.msra.mxu0 %v1873
    %1988 = vmatpush.bf16.msra.mxu0 %v1871
    %1989 = vmatpush.bf16.msra.mxu0 %v1869
    %1990 = vmatpush.bf16.msra.mxu0 %v1867
    %1991 = vmatpush.bf16.msra.mxu0 %v1865
    %1992 = vmatpush.bf16.msra.mxu0 %v1863
    %1993 = vmatmul.bf16.gmra.mxu0 %v1567
    %v1994 = vpop.f32.mrf.mxu0
    %v1995 = vadd.f32 %v1982, %v1994
    %v1996 = vpop.f32.mrf.mxu0
    %1997 = vdwg.mxu0
    %1998 = vmatpush.bf16.msra.mxu0 %v1893
    %1999 = vmatpush.bf16.msra.mxu0 %v1891
    %2000 = vmatpush.bf16.msra.mxu0 %v1889
    %2001 = vmatpush.bf16.msra.mxu0 %v1887
    %2002 = vmatpush.bf16.msra.mxu0 %v1885
    %2003 = vmatpush.bf16.msra.mxu0 %v1883
    %2004 = vmatpush.bf16.msra.mxu0 %v1881
    %2005 = vmatpush.bf16.msra.mxu0 %v1879
    %2006 = vmatmul.bf16.gmra.mxu0 %v1568
    %v2007 = vpop.f32.mrf.mxu0
    %v2008 = vadd.f32 %v1995, %v2007
    %v2009 = vpop.f32.mrf.mxu0
    %2010 = vdwg.mxu0
    %2011 = vmatpush.bf16.msra.mxu0 %v1846
    %2012 = vmatpush.bf16.msra.mxu0 %v1844
    %2013 = vmatpush.bf16.msra.mxu0 %v1842
    %2014 = vmatpush.bf16.msra.mxu0 %v1840
    %2015 = vmatpush.bf16.msra.mxu0 %v1838
    %2016 = vmatpush.bf16.msra.mxu0 %v1836
    %2017 = vmatpush.bf16.msra.mxu0 %v1834
    %2018 = vmatpush.bf16.msra.mxu0 %v1832
    %2019 = vmatmul.bf16.gmra.mxu0 %v1565
    %v2020 = vpop.f32.mrf.mxu0
    %v2021 = vadd.f32 %v1636, %v2020
    %v2022 = vpop.f32.mrf.mxu0
    %2023 = vdwg.mxu0
    %2024 = vmatpush.bf16.msra.mxu0 %v1862
    %2025 = vmatpush.bf16.msra.mxu0 %v1860
    %2026 = vmatpush.bf16.msra.mxu0 %v1858
    %2027 = vmatpush.bf16.msra.mxu0 %v1856
    %2028 = vmatpush.bf16.msra.mxu0 %v1854
    %2029 = vmatpush.bf16.msra.mxu0 %v1852
    %2030 = vmatpush.bf16.msra.mxu0 %v1850
    %2031 = vmatpush.bf16.msra.mxu0 %v1848
    %2032 = vmatmul.bf16.gmra.mxu0 %v1566
    %v2033 = vpop.f32.mrf.mxu0
    %v2034 = vadd.f32 %v2021, %v2033
    %v2035 = vpop.f32.mrf.mxu0
    %2036 = vdwg.mxu0
    %2037 = vmatpush.bf16.msra.mxu0 %v1878
    %2038 = vmatpush.bf16.msra.mxu0 %v1876
    %2039 = vmatpush.bf16.msra.mxu0 %v1874
    %2040 = vmatpush.bf16.msra.mxu0 %v1872
    %2041 = vmatpush.bf16.msra.mxu0 %v1870
    %2042 = vmatpush.bf16.msra.mxu0 %v1868
    %2043 = vmatpush.bf16.msra.mxu0 %v1866
    %2044 = vmatpush.bf16.msra.mxu0 %v1864
    %2045 = vmatmul.bf16.gmra.mxu0 %v1567
    %v2046 = vpop.f32.mrf.mxu0
    %v2047 = vadd.f32 %v2034, %v2046
    %v2048 = vpop.f32.mrf.mxu0
    %2049 = vdwg.mxu0
    %2050 = vmatpush.bf16.msra.mxu0 %v1894
    %2051 = vmatpush.bf16.msra.mxu0 %v1892
    %2052 = vmatpush.bf16.msra.mxu0 %v1890
    %2053 = vmatpush.bf16.msra.mxu0 %v1888
    %2054 = vmatpush.bf16.msra.mxu0 %v1886
    %2055 = vmatpush.bf16.msra.mxu0 %v1884
    %2056 = vmatpush.bf16.msra.mxu0 %v1882
    %2057 = vmatpush.bf16.msra.mxu0 %v1880
    %2058 = vmatmul.bf16.gmra.mxu0 %v1568
    %v2059 = vpop.f32.mrf.mxu0
    %v2060 = vadd.f32 %v2047, %v2059
    %v2061 = vpop.f32.mrf.mxu0
    %2062 = vdwg.mxu0
    %v2063 = vmax.f32 %v2008, 0.0
    %v2064 = vmax.f32 %v2060, 0.0
    %v2065 = vld [vmem:[%s5] sm:$0x3]
    %v2067 = vperm.slane %v2065, 0
    %v2068 = vperm.slane %v2065, 1
    %v2071 = vmul.f32 %v2063, %v2067
    %v2072 = vmul.f32 %v2064, %v2068
    %v2073 = vld [vmem:[%s7] sm:$0xff]
    %v2074 = vunpack.c.l.bf16 %v2073
    %v2075 = vunpack.c.h.bf16 %v2073
    %v2076 = vmul.f32 %v2071, %v2074
    %v2077 = vmul.f32 %v2072, %v2075
    %v2078 = vadd.f32 %v2076, %v2077
    %2079 = vadd.xlane.f32.xlu0 %v2078
    %v2080 = vpop.xlane.xlu0 %2079
    %s2081 = scalar_lea.vmem %s7, 8
    %v2082 = vld [vmem:[%s2081] sm:$0xff]
    %v2083 = vunpack.c.l.bf16 %v2082
    %v2084 = vunpack.c.h.bf16 %v2082
    %v2085 = vmul.f32 %v2071, %v2083
    %v2086 = vmul.f32 %v2072, %v2084
    %v2087 = vadd.f32 %v2085, %v2086
    %2088 = vadd.xlane.f32.xlu0 %v2087
    %v2089 = vpop.xlane.xlu0 %2088
    %vm2090 = vcmask 7168
    %v2091 = vsel %vm2090, %v2080, %v2089
    %v2092 = vld [vmem:[#allocation2] sm:$0x1]
    %v2094 = vperm.slane %v2092, 0
    %2095 = vset.pattern.permute.xlu0 0
    %2096 = vperm.xlu0 %2095, %v2094
    %v2097 = vpop.permute.xlu0 %2096
    %v2099 = vadd.f32 %v2091, %v2097
    %vm2100 = vcmask 15360
    %2101 = vst.msk [vmem:[%s8] sm:$0xff] %vm2100, %v2099
    // Predicated region
    $region42: #{_rdrop_head_train.1} parent=1 // pred_check
      _
    $region43: #{_rdrop_head_train.1} parent=1 // pred_check_branch
      %2103 = sbr.rel (0) target = $region45
    $region44: #{_rdrop_head_train.1} parent=1 // pred_region
      _
    $region45: #{_rdrop_head_train.1} parent=1 // pred_fallthru
      _
    // Predicated region
    $region46: #{_rdrop_head_train.1} parent=1 // pred_check
      _
    $region47: #{_rdrop_head_train.1} parent=1 // pred_check_branch
      %2105 = sbr.rel (0) target = $region49
    $region48: #{_rdrop_head_train.1} parent=1 // pred_region
      _
    $region49: #{_rdrop_head_train.1} parent=1 // pred_fallthru
      _
    %2106 = vsyncpa [#allocation4], 1
    %2107 = vsyncpa [#allocation6], 1

</llo_original>
